<compile_context>
chip_gen: v7x
topology: tpu7x:2x2x1
jax: 0.10.0
libtpu: 0.0.40
codegen_flags: <defaults>
</compile_context>

<pallas_src>
import functools
import math
import numpy as np
import jax
import jax.numpy as jnp
from jax.experimental import pallas as pl
from jax.experimental.pallas import tpu as pltpu

LRELU_SLOPE = 0.2
MAP_GAIN = math.sqrt(2.0)          # StyleGAN lrelu activation gain
GAIN_POS = MAP_GAIN                # lrelu(+) * gain, folded
GAIN_NEG = MAP_GAIN * LRELU_SLOPE  # lrelu(-) * gain, folded
PIXNORM_EPS = 1e-8


def _round_up(x, m):
    return (x + m - 1) // m * m


def _slab_layout(zdim, hidden, n_layers):
    """Row offsets of the packed parameter slab (all sections sublane-8 aligned)."""
    r_b1 = _round_up(zdim, 8)            # miner bias 1
    r_w2 = _round_up(r_b1 + 1, 8)        # miner head weight (hidden, L*zdim)
    r_b2 = _round_up(r_w2 + hidden, 8)   # miner head bias
    r_gb = _round_up(r_b2 + 1, 8)        # mapping biases (tiled to L*zdim), n_layers rows
    n_rows = _round_up(r_gb + n_layers, 8)
    return r_b1, r_w2, r_b2, r_gb, n_rows


# --------------------------- fused miner + mapping kernel ---------------------------
def fused_minegan_kernel(z0_ref, slab_ref, gw_ref, out_ref, *,
                         zdim, hidden, L, n_layers, r_b1, r_w2, r_b2, r_gb):
    """Single gridless step: miner MLP -> pixel-norm -> 8 mapping FC layers.

    z0_ref  : (N, zdim)                     input latents
    slab_ref: (n_rows, L*zdim)              packed miner params + tiled mapping biases
    gw_ref  : (n_layers+1, L*zdim, L*zdim)  block-diag mapping weights; last = ones block
    out_ref : (N, L*zdim)                   lane-dense output (one unmasked store)
    """
    D = L * zdim
    x0 = z0_ref[...]                                            # (N, zdim)

    # ---- miner: Linear -> LeakyReLU(0.2) -> Linear (one matmul each) ----
    w1 = slab_ref[0:zdim, 0:hidden]                             # (zdim, hidden)
    b1 = slab_ref[r_b1:r_b1 + 1, 0:hidden]                      # (1, hidden)
    h = jnp.dot(x0, w1, preferred_element_type=jnp.float32) + b1
    h = jnp.where(h >= 0, h, LRELU_SLOPE * h)

    w2 = slab_ref[r_w2:r_w2 + hidden, :]                        # (hidden, D)
    b2 = slab_ref[r_b2:r_b2 + 1, :]                             # (1, D)
    z = jnp.dot(h, w2, preferred_element_type=jnp.float32) + b2  # (N, D) lane-dense

    # ---- per-chunk 2nd-moment normalize, batched via block-diagonal ones matmul ----
    ssq = jnp.dot(z * z, gw_ref[n_layers], preferred_element_type=jnp.float32)  # (N, D)
    x = z * jax.lax.rsqrt(ssq * (1.0 / zdim) + PIXNORM_EPS)

    # ---- mapping MLP: n_layers x (one lane-dense matmul + bias + gained lrelu) ----
    for li in range(n_layers):
        gb = slab_ref[r_gb + li:r_gb + li + 1, :]               # (1, D) tiled bias
        y = jnp.dot(x, gw_ref[li], preferred_element_type=jnp.float32) + gb
        x = y * jnp.where(y >= 0, GAIN_POS, GAIN_NEG)           # lrelu * sqrt(2), 1 sel + 1 mul

    out_ref[...] = x                                            # single full-width store


# ------------------------ one-time parameter packing (hoisted) ------------------------
def prepare_params(params, zdim):
    """Pack parameters into 2 kernel operands.  Called ONCE, outside the jitted forward."""
    hidden = params["m_w1"].shape[1]
    D = params["m_w2"].shape[1]
    L = D // zdim
    nl = params["g_w"].shape[0]
    r_b1, r_w2, r_b2, r_gb, n_rows = _slab_layout(zdim, hidden, nl)

    slab = jnp.zeros((n_rows, D), jnp.float32)
    slab = slab.at[0:zdim, 0:hidden].set(params["m_w1"])
    slab = slab.at[r_b1:r_b1 + 1, 0:hidden].set(params["m_b1"])
    slab = slab.at[r_w2:r_w2 + hidden, :].set(params["m_w2"])
    slab = slab.at[r_b2:r_b2 + 1, :].set(params["m_b2"])
    slab = slab.at[r_gb:r_gb + nl, :].set(jnp.tile(params["g_b"][:, 0, :], (1, L)))

    # Block-diagonal mapping weights (all L chunks share the same per-chunk weight), plus
    # a block-diagonal ones matrix used for the per-chunk sum-of-squares reduction.
    eyeL = jnp.eye(L, dtype=jnp.float32)
    w_bd = jnp.einsum("ab,nij->naibj", eyeL, params["g_w"]).reshape(nl, D, D)
    ones_bd = jnp.kron(eyeL, jnp.ones((zdim, zdim), jnp.float32))
    gw_stack = jnp.concatenate([w_bd, ones_bd[None]], axis=0)   # (nl+1, D, D)
    return slab, gw_stack


# ------------------------------- full LayeredMineGAN --------------------------------
def make_forward(zdim, hidden, L, n_layers):
    D = L * zdim
    r_b1, r_w2, r_b2, r_gb, n_rows = _slab_layout(zdim, hidden, n_layers)
    kernel = functools.partial(
        fused_minegan_kernel, zdim=zdim, hidden=hidden, L=L, n_layers=n_layers,
        r_b1=r_b1, r_w2=r_w2, r_b2=r_b2, r_gb=r_gb)

    @jax.jit
    def forward(z0, slab, gw_stack):
        N = z0.shape[0]
        vmem = pl.BlockSpec(memory_space=pltpu.MemorySpace.VMEM)  # whole-array, VMEM resident
        cost = pl.CostEstimate(
            flops=2 * (N * zdim * hidden + N * hidden * D + (n_layers + 1) * N * D * D),
            transcendentals=N * D,
            bytes_accessed=4 * (N * zdim + n_rows * D + (n_layers + 1) * D * D + N * D))
        w = pl.pallas_call(
            kernel,
            out_shape=jax.ShapeDtypeStruct((N, D), jnp.float32),
            in_specs=[vmem, vmem, vmem],
            out_specs=vmem,
            cost_estimate=cost,
        )(z0, slab, gw_stack)
        # Gmapping broadcasts to (N*L, num_ws, zdim); w[:, 0] equals the mapping output,
        # so only this free metadata reshape remains.
        return w.reshape(N, L, zdim)

    return forward


# -------------------------------- pure-JAX reference ---------------------------------
def reference_forward(z0, params):
    N, zdim = z0.shape
    hp = jax.lax.Precision.HIGHEST
    pre = jnp.dot(z0, params["m_w1"], precision=hp) + params["m_b1"]
    h = jnp.where(pre >= 0, pre, LRELU_SLOPE * pre)
    z = jnp.dot(h, params["m_w2"], precision=hp) + params["m_b2"]
    L = z.shape[1] // zdim
    x = z.reshape(N * L, zdim)
    x = x * jax.lax.rsqrt(jnp.mean(x * x, axis=1, keepdims=True) + PIXNORM_EPS)
    for li in range(params["g_w"].shape[0]):
        x = jnp.dot(x, params["g_w"][li], precision=hp) + params["g_b"][li]
        x = jnp.where(x >= 0, x, LRELU_SLOPE * x) * MAP_GAIN
    return x.reshape(N, L, zdim)


def init_params(key, zdim, hidden, L, num_map_layers):
    ks = jax.random.split(key, 6)
    out_dim = L * zdim
    # miner params (plain init)
    m_w1 = jax.random.normal(ks[0], (zdim, hidden), jnp.float32) * 0.1
    m_b1 = jax.random.normal(ks[1], (1, hidden), jnp.float32) * 0.01
    m_w2 = jax.random.normal(ks[2], (hidden, out_dim), jnp.float32) * 0.1
    m_b2 = jax.random.normal(ks[3], (1, out_dim), jnp.float32) * 0.01
    # StyleGAN2 equalized-LR FC: raw param ~ N(0,1)/lr_mul, runtime scale = lr_mul/sqrt(fan_in)
    # => effective weight std = 1/sqrt(fan_in).  Bake the runtime weight directly.
    g_w = jax.random.normal(ks[4], (num_map_layers, zdim, zdim), jnp.float32) / math.sqrt(zdim)
    g_b = jnp.zeros((num_map_layers, 1, zdim), jnp.float32)
    return {"m_w1": m_w1, "m_b1": m_b1, "m_w2": m_w2, "m_b2": m_b2,
            "g_w": g_w, "g_b": g_b}


if __name__ == "__main__":
    N, zdim, hidden, L, num_map_layers = 4, 32, 64, 8, 8

    key = jax.random.PRNGKey(0)
    k_z, k_p = jax.random.split(key)
    z0 = jax.random.normal(k_z, (N, zdim), jnp.float32)
    params = init_params(k_p, zdim, hidden, L, num_map_layers)

    # One-time parameter packing (hoisted out of the per-call jitted forward).
    slab, gw_stack = jax.block_until_ready(prepare_params(params, zdim))
    forward = make_forward(zdim, hidden, L, num_map_layers)

    out = jax.block_until_ready(forward(z0, slab, gw_stack))

    ref = reference_forward(z0, params)
    assert out.shape == (N, L, zdim), out.shape
    # Kernel dots use default MXU precision (bf16 passes, f32 accumulate); reference uses
    # Precision.HIGHEST, hence the tolerance across the 11-matmul chain.
    np.testing.assert_allclose(np.asarray(out), np.asarray(ref), rtol=2e-2, atol=5e-3)

    print("KERNEL_OK")
</pallas_src>

<mosaic_0001>
module attributes {stable_mosaic.version = 11 : i64} {
  func.func @fused_minegan_kernel(%arg0: memref<4x32xf32, #tpu.memory_space<vmem>>, %arg1: memref<120x256xf32, #tpu.memory_space<vmem>>, %arg2: memref<9x256x256xf32, #tpu.memory_space<vmem>>, %arg3: memref<4x256xf32, #tpu.memory_space<vmem>>) attributes {dimension_semantics = [], scalar_prefetch = 0 : i64, scratch_operands = 0 : i64, tpu.core_type = #tpu.core_type<tc>} {
    %c0 = arith.constant 0 : index
    %c0_0 = arith.constant 0 : index
    %0 = vector.load %arg0[%c0, %c0_0] : memref<4x32xf32, #tpu.memory_space<vmem>>, vector<4x32xf32>
    %c0_1 = arith.constant 0 : index
    %c0_2 = arith.constant 0 : index
    %1 = vector.load %arg1[%c0_1, %c0_2] : memref<120x256xf32, #tpu.memory_space<vmem>>, vector<32x64xf32>
    %c32 = arith.constant 32 : index
    %c0_3 = arith.constant 0 : index
    %2 = vector.load %arg1[%c32, %c0_3] : memref<120x256xf32, #tpu.memory_space<vmem>>, vector<1x64xf32>
    %cst = arith.constant dense<0.000000e+00> : vector<4x64xf32>
    %3 = tpu.matmul %0, %1, %cst {dimension_numbers = #tpu.dot_dimension_numbers<[1], [0], [0], [1], [0, 0, 1, 1], [], []>} : vector<4x32xf32>, vector<32x64xf32>, vector<4x64xf32> -> vector<4x64xf32>
    %4 = vector.broadcast %2 : vector<1x64xf32> to vector<4x64xf32>
    %5 = arith.addf %3, %4 : vector<4x64xf32>
    %cst_4 = arith.constant 0.000000e+00 : f32
    %6 = vector.broadcast %cst_4 : f32 to vector<4x64xf32>
    %7 = arith.cmpf oge, %5, %6 : vector<4x64xf32>
    %cst_5 = arith.constant 2.000000e-01 : f32
    %8 = vector.broadcast %cst_5 : f32 to vector<4x64xf32>
    %9 = arith.mulf %8, %5 : vector<4x64xf32>
    %10 = arith.select %7, %5, %9 : vector<4x64xi1>, vector<4x64xf32>
    %c40 = arith.constant 40 : index
    %c0_6 = arith.constant 0 : index
    %11 = vector.load %arg1[%c40, %c0_6] : memref<120x256xf32, #tpu.memory_space<vmem>>, vector<64x256xf32>
    %c104 = arith.constant 104 : index
    %c0_7 = arith.constant 0 : index
    %12 = vector.load %arg1[%c104, %c0_7] : memref<120x256xf32, #tpu.memory_space<vmem>>, vector<1x256xf32>
    %cst_8 = arith.constant dense<0.000000e+00> : vector<4x256xf32>
    %13 = tpu.matmul %10, %11, %cst_8 {dimension_numbers = #tpu.dot_dimension_numbers<[1], [0], [0], [1], [0, 0, 1, 1], [], []>} : vector<4x64xf32>, vector<64x256xf32>, vector<4x256xf32> -> vector<4x256xf32>
    %14 = vector.broadcast %12 : vector<1x256xf32> to vector<4x256xf32>
    %15 = arith.addf %13, %14 : vector<4x256xf32>
    %16 = arith.mulf %15, %15 : vector<4x256xf32>
    %c8 = arith.constant 8 : index
    %c0_9 = arith.constant 0 : index
    %c0_10 = arith.constant 0 : index
    %17 = vector.load %arg2[%c8, %c0_9, %c0_10] : memref<9x256x256xf32, #tpu.memory_space<vmem>>, vector<1x256x256xf32>
    %18 = vector.shape_cast %17 : vector<1x256x256xf32> to vector<256x256xf32>
    %cst_11 = arith.constant dense<0.000000e+00> : vector<4x256xf32>
    %19 = tpu.matmul %16, %18, %cst_11 {dimension_numbers = #tpu.dot_dimension_numbers<[1], [0], [0], [1], [0, 0, 1, 1], [], []>} : vector<4x256xf32>, vector<256x256xf32>, vector<4x256xf32> -> vector<4x256xf32>
    %cst_12 = arith.constant 3.125000e-02 : f32
    %20 = vector.broadcast %cst_12 : f32 to vector<4x256xf32>
    %21 = arith.mulf %19, %20 : vector<4x256xf32>
    %cst_13 = arith.constant 9.99999993E-9 : f32
    %22 = vector.broadcast %cst_13 : f32 to vector<4x256xf32>
    %23 = arith.addf %21, %22 : vector<4x256xf32>
    %24 = math.rsqrt %23 : vector<4x256xf32>
    %25 = arith.mulf %15, %24 : vector<4x256xf32>
    %c112 = arith.constant 112 : index
    %c0_14 = arith.constant 0 : index
    %26 = vector.load %arg1[%c112, %c0_14] : memref<120x256xf32, #tpu.memory_space<vmem>>, vector<1x256xf32>
    %c0_15 = arith.constant 0 : index
    %c0_16 = arith.constant 0 : index
    %c0_17 = arith.constant 0 : index
    %27 = vector.load %arg2[%c0_15, %c0_16, %c0_17] : memref<9x256x256xf32, #tpu.memory_space<vmem>>, vector<1x256x256xf32>
    %28 = vector.shape_cast %27 : vector<1x256x256xf32> to vector<256x256xf32>
    %cst_18 = arith.constant dense<0.000000e+00> : vector<4x256xf32>
    %29 = tpu.matmul %25, %28, %cst_18 {dimension_numbers = #tpu.dot_dimension_numbers<[1], [0], [0], [1], [0, 0, 1, 1], [], []>} : vector<4x256xf32>, vector<256x256xf32>, vector<4x256xf32> -> vector<4x256xf32>
    %30 = vector.broadcast %26 : vector<1x256xf32> to vector<4x256xf32>
    %31 = arith.addf %29, %30 : vector<4x256xf32>
    %cst_19 = arith.constant 0.000000e+00 : f32
    %32 = vector.broadcast %cst_19 : f32 to vector<4x256xf32>
    %33 = arith.cmpf oge, %31, %32 : vector<4x256xf32>
    %cst_20 = arith.constant 1.41421354 : f32
    %cst_21 = arith.constant 0.282842726 : f32
    %34 = vector.broadcast %cst_20 : f32 to vector<4x256xf32>
    %35 = vector.broadcast %cst_21 : f32 to vector<4x256xf32>
    %36 = arith.select %33, %34, %35 : vector<4x256xi1>, vector<4x256xf32>
    %37 = arith.mulf %31, %36 : vector<4x256xf32>
    %c113 = arith.constant 113 : index
    %c0_22 = arith.constant 0 : index
    %38 = vector.load %arg1[%c113, %c0_22] : memref<120x256xf32, #tpu.memory_space<vmem>>, vector<1x256xf32>
    %c1 = arith.constant 1 : index
    %c0_23 = arith.constant 0 : index
    %c0_24 = arith.constant 0 : index
    %39 = vector.load %arg2[%c1, %c0_23, %c0_24] : memref<9x256x256xf32, #tpu.memory_space<vmem>>, vector<1x256x256xf32>
    %40 = vector.shape_cast %39 : vector<1x256x256xf32> to vector<256x256xf32>
    %cst_25 = arith.constant dense<0.000000e+00> : vector<4x256xf32>
    %41 = tpu.matmul %37, %40, %cst_25 {dimension_numbers = #tpu.dot_dimension_numbers<[1], [0], [0], [1], [0, 0, 1, 1], [], []>} : vector<4x256xf32>, vector<256x256xf32>, vector<4x256xf32> -> vector<4x256xf32>
    %42 = vector.broadcast %38 : vector<1x256xf32> to vector<4x256xf32>
    %43 = arith.addf %41, %42 : vector<4x256xf32>
    %cst_26 = arith.constant 0.000000e+00 : f32
    %44 = vector.broadcast %cst_26 : f32 to vector<4x256xf32>
    %45 = arith.cmpf oge, %43, %44 : vector<4x256xf32>
    %cst_27 = arith.constant 1.41421354 : f32
    %cst_28 = arith.constant 0.282842726 : f32
    %46 = vector.broadcast %cst_27 : f32 to vector<4x256xf32>
    %47 = vector.broadcast %cst_28 : f32 to vector<4x256xf32>
    %48 = arith.select %45, %46, %47 : vector<4x256xi1>, vector<4x256xf32>
    %49 = arith.mulf %43, %48 : vector<4x256xf32>
    %c114 = arith.constant 114 : index
    %c0_29 = arith.constant 0 : index
    %50 = vector.load %arg1[%c114, %c0_29] : memref<120x256xf32, #tpu.memory_space<vmem>>, vector<1x256xf32>
    %c2 = arith.constant 2 : index
    %c0_30 = arith.constant 0 : index
    %c0_31 = arith.constant 0 : index
    %51 = vector.load %arg2[%c2, %c0_30, %c0_31] : memref<9x256x256xf32, #tpu.memory_space<vmem>>, vector<1x256x256xf32>
    %52 = vector.shape_cast %51 : vector<1x256x256xf32> to vector<256x256xf32>
    %cst_32 = arith.constant dense<0.000000e+00> : vector<4x256xf32>
    %53 = tpu.matmul %49, %52, %cst_32 {dimension_numbers = #tpu.dot_dimension_numbers<[1], [0], [0], [1], [0, 0, 1, 1], [], []>} : vector<4x256xf32>, vector<256x256xf32>, vector<4x256xf32> -> vector<4x256xf32>
    %54 = vector.broadcast %50 : vector<1x256xf32> to vector<4x256xf32>
    %55 = arith.addf %53, %54 : vector<4x256xf32>
    %cst_33 = arith.constant 0.000000e+00 : f32
    %56 = vector.broadcast %cst_33 : f32 to vector<4x256xf32>
    %57 = arith.cmpf oge, %55, %56 : vector<4x256xf32>
    %cst_34 = arith.constant 1.41421354 : f32
    %cst_35 = arith.constant 0.282842726 : f32
    %58 = vector.broadcast %cst_34 : f32 to vector<4x256xf32>
    %59 = vector.broadcast %cst_35 : f32 to vector<4x256xf32>
    %60 = arith.select %57, %58, %59 : vector<4x256xi1>, vector<4x256xf32>
    %61 = arith.mulf %55, %60 : vector<4x256xf32>
    %c115 = arith.constant 115 : index
    %c0_36 = arith.constant 0 : index
    %62 = vector.load %arg1[%c115, %c0_36] : memref<120x256xf32, #tpu.memory_space<vmem>>, vector<1x256xf32>
    %c3 = arith.constant 3 : index
    %c0_37 = arith.constant 0 : index
    %c0_38 = arith.constant 0 : index
    %63 = vector.load %arg2[%c3, %c0_37, %c0_38] : memref<9x256x256xf32, #tpu.memory_space<vmem>>, vector<1x256x256xf32>
    %64 = vector.shape_cast %63 : vector<1x256x256xf32> to vector<256x256xf32>
    %cst_39 = arith.constant dense<0.000000e+00> : vector<4x256xf32>
    %65 = tpu.matmul %61, %64, %cst_39 {dimension_numbers = #tpu.dot_dimension_numbers<[1], [0], [0], [1], [0, 0, 1, 1], [], []>} : vector<4x256xf32>, vector<256x256xf32>, vector<4x256xf32> -> vector<4x256xf32>
    %66 = vector.broadcast %62 : vector<1x256xf32> to vector<4x256xf32>
    %67 = arith.addf %65, %66 : vector<4x256xf32>
    %cst_40 = arith.constant 0.000000e+00 : f32
    %68 = vector.broadcast %cst_40 : f32 to vector<4x256xf32>
    %69 = arith.cmpf oge, %67, %68 : vector<4x256xf32>
    %cst_41 = arith.constant 1.41421354 : f32
    %cst_42 = arith.constant 0.282842726 : f32
    %70 = vector.broadcast %cst_41 : f32 to vector<4x256xf32>
    %71 = vector.broadcast %cst_42 : f32 to vector<4x256xf32>
    %72 = arith.select %69, %70, %71 : vector<4x256xi1>, vector<4x256xf32>
    %73 = arith.mulf %67, %72 : vector<4x256xf32>
    %c116 = arith.constant 116 : index
    %c0_43 = arith.constant 0 : index
    %74 = vector.load %arg1[%c116, %c0_43] : memref<120x256xf32, #tpu.memory_space<vmem>>, vector<1x256xf32>
    %c4 = arith.constant 4 : index
    %c0_44 = arith.constant 0 : index
    %c0_45 = arith.constant 0 : index
    %75 = vector.load %arg2[%c4, %c0_44, %c0_45] : memref<9x256x256xf32, #tpu.memory_space<vmem>>, vector<1x256x256xf32>
    %76 = vector.shape_cast %75 : vector<1x256x256xf32> to vector<256x256xf32>
    %cst_46 = arith.constant dense<0.000000e+00> : vector<4x256xf32>
    %77 = tpu.matmul %73, %76, %cst_46 {dimension_numbers = #tpu.dot_dimension_numbers<[1], [0], [0], [1], [0, 0, 1, 1], [], []>} : vector<4x256xf32>, vector<256x256xf32>, vector<4x256xf32> -> vector<4x256xf32>
    %78 = vector.broadcast %74 : vector<1x256xf32> to vector<4x256xf32>
    %79 = arith.addf %77, %78 : vector<4x256xf32>
    %cst_47 = arith.constant 0.000000e+00 : f32
    %80 = vector.broadcast %cst_47 : f32 to vector<4x256xf32>
    %81 = arith.cmpf oge, %79, %80 : vector<4x256xf32>
    %cst_48 = arith.constant 1.41421354 : f32
    %cst_49 = arith.constant 0.282842726 : f32
    %82 = vector.broadcast %cst_48 : f32 to vector<4x256xf32>
    %83 = vector.broadcast %cst_49 : f32 to vector<4x256xf32>
    %84 = arith.select %81, %82, %83 : vector<4x256xi1>, vector<4x256xf32>
    %85 = arith.mulf %79, %84 : vector<4x256xf32>
    %c117 = arith.constant 117 : index
    %c0_50 = arith.constant 0 : index
    %86 = vector.load %arg1[%c117, %c0_50] : memref<120x256xf32, #tpu.memory_space<vmem>>, vector<1x256xf32>
    %c5 = arith.constant 5 : index
    %c0_51 = arith.constant 0 : index
    %c0_52 = arith.constant 0 : index
    %87 = vector.load %arg2[%c5, %c0_51, %c0_52] : memref<9x256x256xf32, #tpu.memory_space<vmem>>, vector<1x256x256xf32>
    %88 = vector.shape_cast %87 : vector<1x256x256xf32> to vector<256x256xf32>
    %cst_53 = arith.constant dense<0.000000e+00> : vector<4x256xf32>
    %89 = tpu.matmul %85, %88, %cst_53 {dimension_numbers = #tpu.dot_dimension_numbers<[1], [0], [0], [1], [0, 0, 1, 1], [], []>} : vector<4x256xf32>, vector<256x256xf32>, vector<4x256xf32> -> vector<4x256xf32>
    %90 = vector.broadcast %86 : vector<1x256xf32> to vector<4x256xf32>
    %91 = arith.addf %89, %90 : vector<4x256xf32>
    %cst_54 = arith.constant 0.000000e+00 : f32
    %92 = vector.broadcast %cst_54 : f32 to vector<4x256xf32>
    %93 = arith.cmpf oge, %91, %92 : vector<4x256xf32>
    %cst_55 = arith.constant 1.41421354 : f32
    %cst_56 = arith.constant 0.282842726 : f32
    %94 = vector.broadcast %cst_55 : f32 to vector<4x256xf32>
    %95 = vector.broadcast %cst_56 : f32 to vector<4x256xf32>
    %96 = arith.select %93, %94, %95 : vector<4x256xi1>, vector<4x256xf32>
    %97 = arith.mulf %91, %96 : vector<4x256xf32>
    %c118 = arith.constant 118 : index
    %c0_57 = arith.constant 0 : index
    %98 = vector.load %arg1[%c118, %c0_57] : memref<120x256xf32, #tpu.memory_space<vmem>>, vector<1x256xf32>
    %c6 = arith.constant 6 : index
    %c0_58 = arith.constant 0 : index
    %c0_59 = arith.constant 0 : index
    %99 = vector.load %arg2[%c6, %c0_58, %c0_59] : memref<9x256x256xf32, #tpu.memory_space<vmem>>, vector<1x256x256xf32>
    %100 = vector.shape_cast %99 : vector<1x256x256xf32> to vector<256x256xf32>
    %cst_60 = arith.constant dense<0.000000e+00> : vector<4x256xf32>
    %101 = tpu.matmul %97, %100, %cst_60 {dimension_numbers = #tpu.dot_dimension_numbers<[1], [0], [0], [1], [0, 0, 1, 1], [], []>} : vector<4x256xf32>, vector<256x256xf32>, vector<4x256xf32> -> vector<4x256xf32>
    %102 = vector.broadcast %98 : vector<1x256xf32> to vector<4x256xf32>
    %103 = arith.addf %101, %102 : vector<4x256xf32>
    %cst_61 = arith.constant 0.000000e+00 : f32
    %104 = vector.broadcast %cst_61 : f32 to vector<4x256xf32>
    %105 = arith.cmpf oge, %103, %104 : vector<4x256xf32>
    %cst_62 = arith.constant 1.41421354 : f32
    %cst_63 = arith.constant 0.282842726 : f32
    %106 = vector.broadcast %cst_62 : f32 to vector<4x256xf32>
    %107 = vector.broadcast %cst_63 : f32 to vector<4x256xf32>
    %108 = arith.select %105, %106, %107 : vector<4x256xi1>, vector<4x256xf32>
    %109 = arith.mulf %103, %108 : vector<4x256xf32>
    %c119 = arith.constant 119 : index
    %c0_64 = arith.constant 0 : index
    %110 = vector.load %arg1[%c119, %c0_64] : memref<120x256xf32, #tpu.memory_space<vmem>>, vector<1x256xf32>
    %c7 = arith.constant 7 : index
    %c0_65 = arith.constant 0 : index
    %c0_66 = arith.constant 0 : index
    %111 = vector.load %arg2[%c7, %c0_65, %c0_66] : memref<9x256x256xf32, #tpu.memory_space<vmem>>, vector<1x256x256xf32>
    %112 = vector.shape_cast %111 : vector<1x256x256xf32> to vector<256x256xf32>
    %cst_67 = arith.constant dense<0.000000e+00> : vector<4x256xf32>
    %113 = tpu.matmul %109, %112, %cst_67 {dimension_numbers = #tpu.dot_dimension_numbers<[1], [0], [0], [1], [0, 0, 1, 1], [], []>} : vector<4x256xf32>, vector<256x256xf32>, vector<4x256xf32> -> vector<4x256xf32>
    %114 = vector.broadcast %110 : vector<1x256xf32> to vector<4x256xf32>
    %115 = arith.addf %113, %114 : vector<4x256xf32>
    %cst_68 = arith.constant 0.000000e+00 : f32
    %116 = vector.broadcast %cst_68 : f32 to vector<4x256xf32>
    %117 = arith.cmpf oge, %115, %116 : vector<4x256xf32>
    %cst_69 = arith.constant 1.41421354 : f32
    %cst_70 = arith.constant 0.282842726 : f32
    %118 = vector.broadcast %cst_69 : f32 to vector<4x256xf32>
    %119 = vector.broadcast %cst_70 : f32 to vector<4x256xf32>
    %120 = arith.select %117, %118, %119 : vector<4x256xi1>, vector<4x256xf32>
    %121 = arith.mulf %115, %120 : vector<4x256xf32>
    %c0_71 = arith.constant 0 : index
    %c0_72 = arith.constant 0 : index
    %122 = vector.load %arg3[%c0_71, %c0_72] : memref<4x256xf32, #tpu.memory_space<vmem>>, vector<4x256xf32>
    tpu.vector_store %arg3[%c0_71, %c0_72], %121 {strides = array<i32>} : memref<4x256xf32, #tpu.memory_space<vmem>>, vector<4x256xf32>,
    return
  }
}

</mosaic_0001>

<llo_original>
// kernel: forward.1
$region0: #{forward.1}
  #allocation0 [shape = 'u32[]', space=smem, size = 0x4, offset = 0x4, fixed_abs, tag = 'smem constant byte address 0x4 - core index']
  #allocation1 [shape = 'u32[144,128]{1,0:T(1,128)}', space=vmem, size = 0x12000, scoped, tag = 'internal scratch']
  %s0 = inlined_call_operand.hbm [shape: f32[4,32], index: 0, kind: input, shape index: {}]
  %s1 = inlined_call_operand.hbm [shape: f32[120,256], index: 1, kind: input, shape index: {}]
  %s2 = inlined_call_operand.hbm [shape: f32[9,256,256], index: 2, kind: input, shape index: {}]
  %s3 = inlined_call_operand.vmem [shape: f32[4,256], index: 3, kind: output, shape index: {}]
  %s4 = sld [smem:[#allocation0]]
  $region34: #{forward.1} parent=0
    _
  %s6 = ssub.s32 1, %s4
  %s7 = scalar_select 0, %s6, %s4
  $region1: #{forward.1} parent=0
    #allocation2 [shape = 'u8[2048]{0}', space=vmem, size = 0x800, scoped, tag = 'input window, operand 0, single buffered']
    #allocation3 [shape = 's32[1]{0}', space=sflag, size = 0x4, scoped, tag = 'scoped memory for forward.1']
    #allocation4 [shape = 'u8[122880]{0}', space=vmem, size = 0x1e000, scoped, tag = 'input window, operand 1, single buffered']
    #allocation5 [shape = 's32[1]{0}', space=sflag, size = 0x4, scoped, tag = 'scoped memory for forward.1']
    #allocation6 [shape = 'u8[2359296]{0}', space=vmem, size = 0x240000, scoped, tag = 'input window, operand 2, single buffered']
    %8 = vsyncpa [#allocation3], 0
    %9 = vsyncpa [#allocation5], 0
    // Predicated region
    $region2: #{forward.1} parent=1 // pred_check
      _
    $region3: #{forward.1} parent=1 // pred_check_branch
      %11 = sbr.rel (0) target = $region5
    $region4: #{forward.1} parent=1 // pred_region
      %s13 = ssub.s32 64, 64
      %14 = vsyncadd [#allocation3], %s13
      %s16 = sshll.u32 [#allocation2], 4
      %s17 = int_to_ptr.vmem [resolvable:$true] %s16
      %19 = dma.hbm_to_vmem [thread:$0]  %s0, 64, %s17, [#allocation3]
    $region5: #{forward.1} parent=1 // pred_fallthru
      _
    // Predicated region
    $region6: #{forward.1} parent=1 // pred_check
      _
    $region7: #{forward.1} parent=1 // pred_check_branch
      %21 = sbr.rel (0) target = $region9
    $region8: #{forward.1} parent=1 // pred_region
      %s23 = ssub.s32 3840, 3840
      %24 = vsyncadd [#allocation5], %s23
      %s25 = sshll.u32 [#allocation4], 4
      %s26 = int_to_ptr.vmem [resolvable:$true] %s25
      %31 = dma.hbm_to_vmem [thread:$0]  %s1, 3840, %s26, [#allocation5], 256, 256, 16
    $region9: #{forward.1} parent=1 // pred_fallthru
      _
    // Predicated region
    $region10: #{forward.1} parent=1 // pred_check
      _
    $region11: #{forward.1} parent=1 // pred_check_branch
      %33 = sbr.rel (0) target = $region13
    $region12: #{forward.1} parent=1 // pred_region
      %s35 = ssub.s32 73728, 73728
      %36 = vsyncadd [#allocation5], %s35
      %s37 = sshll.u32 [#allocation6], 4
      %s38 = int_to_ptr.vmem [resolvable:$true] %s37
      %43 = dma.hbm_to_vmem [thread:$0]  %s2, 73728, %s38, [#allocation5], 256, 256, 16
    $region13: #{forward.1} parent=1 // pred_fallthru
      _
    // Predicated region
    $region14: #{forward.1} parent=1 // pred_check
      _
    $region15: #{forward.1} parent=1 // pred_check_branch
      %45 = sbr.rel (0) target = $region17
    $region16: #{forward.1} parent=1 // pred_region
      %46 = dma.done [#allocation3], 64
    $region17: #{forward.1} parent=1 // pred_fallthru
      _
    // Predicated region
    $region18: #{forward.1} parent=1 // pred_check
      _
    $region19: #{forward.1} parent=1 // pred_check_branch
      %48 = sbr.rel (0) target = $region21
    $region20: #{forward.1} parent=1 // pred_region
      %49 = dma.done [#allocation5], 3840
    $region21: #{forward.1} parent=1 // pred_fallthru
      _
    // Predicated region
    $region22: #{forward.1} parent=1 // pred_check
      _
    $region23: #{forward.1} parent=1 // pred_check_branch
      %51 = sbr.rel (0) target = $region25
    $region24: #{forward.1} parent=1 // pred_region
      %52 = dma.done [#allocation5], 73728
    $region25: #{forward.1} parent=1 // pred_fallthru
      _
    %v53 = vld [vmem:[#allocation2] sm:$0xf]
    %v54 = vld [vmem:[#allocation4] sm:$0xff]
    %v55 = vld [vmem:[#allocation4 + $0x10] sm:$0xff]
    %v56 = vld [vmem:[#allocation4 + $0x20] sm:$0xff]
    %v57 = vld [vmem:[#allocation4 + $0x30] sm:$0xff]
    %v58 = vld [vmem:[#allocation4 + $0x40] ss:$0 sm:$0xff]
    %vm59 = vcmask 261120
    %v61 = vsel %vm59, %v53, 0
    %63 = vmatprep.subr.mxu0 0.0
    %64 = vmatpush1.msra.mxu0 %v54
    %65 = vmatprep.subr.mxu0 0.0
    %66 = vmatpush1.msra.mxu0 %v55
    %67 = vmatprep.subr.mxu0 0.0
    %68 = vmatpush1.msra.mxu0 %v56
    %69 = vmatprep.subr.mxu0 0.0
    %70 = vmatpush1.msra.mxu0 %v57
    %71 = vmatprep.subr.mxu0 0.0
    %72 = vmatpush1.msra.mxu0 0.0
    %73 = vmatprep.subr.mxu0 0.0
    %74 = vmatpush1.msra.mxu0 0.0
    %75 = vmatprep.subr.mxu0 0.0
    %76 = vmatpush1.msra.mxu0 0.0
    %77 = vmatprep.subr.mxu0 0.0
    %78 = vmatpush1.msra.mxu0 0.0
    %79 = vmatprep.subr.mxu0 0.0
    %80 = vmatpush1.msra.mxu0 0.0
    %81 = vmatprep.subr.mxu0 0.0
    %82 = vmatpush1.msra.mxu0 0.0
    %83 = vmatprep.subr.mxu0 0.0
    %84 = vmatpush1.msra.mxu0 0.0
    %85 = vmatprep.subr.mxu0 0.0
    %86 = vmatpush1.msra.mxu0 0.0
    %87 = vmatprep.subr.mxu0 0.0
    %88 = vmatpush1.msra.mxu0 0.0
    %89 = vmatprep.subr.mxu0 0.0
    %90 = vmatpush1.msra.mxu0 0.0
    %91 = vmatprep.subr.mxu0 0.0
    %92 = vmatpush1.msra.mxu0 0.0
    %93 = vmatprep.subr.mxu0 0.0
    %94 = vmatpush1.msra.mxu0 0.0
    %95 = vmatprep.subr.mxu0 0.0
    %96 = vmatpush1.msra.mxu0 0.0
    %97 = vmatprep.subr.mxu0 0.0
    %98 = vmatpush1.msra.mxu0 0.0
    %99 = vmatprep.subr.mxu0 0.0
    %100 = vmatpush1.msra.mxu0 0.0
    %101 = vmatprep.subr.mxu0 0.0
    %102 = vmatpush1.msra.mxu0 0.0
    %103 = vmatprep.subr.mxu0 0.0
    %104 = vmatpush1.msra.mxu0 0.0
    %105 = vmatprep.subr.mxu0 0.0
    %106 = vmatpush1.msra.mxu0 0.0
    %107 = vmatprep.subr.mxu0 0.0
    %108 = vmatpush1.msra.mxu0 0.0
    %109 = vmatprep.subr.mxu0 0.0
    %110 = vmatpush1.msra.mxu0 0.0
    %111 = vmatprep.subr.mxu0 0.0
    %112 = vmatpush1.msra.mxu0 0.0
    %113 = vmatprep.subr.mxu0 0.0
    %114 = vmatpush1.msra.mxu0 0.0
    %115 = vmatprep.subr.mxu0 0.0
    %116 = vmatpush1.msra.mxu0 0.0
    %117 = vmatprep.subr.mxu0 0.0
    %118 = vmatpush1.msra.mxu0 0.0
    %119 = vmatprep.subr.mxu0 0.0
    %120 = vmatpush1.msra.mxu0 0.0
    %121 = vmatprep.subr.mxu0 0.0
    %122 = vmatpush1.msra.mxu0 0.0
    %123 = vmatprep.subr.mxu0 0.0
    %124 = vmatpush1.msra.mxu0 0.0
    %125 = vmatprep.subr.mxu0 0.0
    %126 = vmatpush1.msra.mxu0 0.0
    %127 = vmatprep.mubr.f32.mxu0 0.0
    %128 = vmatmul.mubr.f32.gmra.mrb[0].mxu0 %v61
    %v129 = vpop.f32.mrb[0].mxu0
    %v130 = vadd.f32 %v58, %v129
    %v131 = vpop.f32.mrb[0].mxu0
    %132 = vdwg.mxu0
    %vm133 = vcmp.ge.f32.partialorder %v130, 0.0
    %v134 = vmul.f32 %v130, 0.2
    %v135 = vsel %vm133, %v130, %v134
    %v136 = vld [vmem:[#allocation4 + $0x50] sm:$0xff]
    %v137 = vld [vmem:[#allocation4 + $0x58] sm:$0xff]
    %v138 = vld [vmem:[#allocation4 + $0x60] sm:$0xff]
    %v139 = vld [vmem:[#allocation4 + $0x68] sm:$0xff]
    %v140 = vld [vmem:[#allocation4 + $0x70] sm:$0xff]
    %v141 = vld [vmem:[#allocation4 + $0x78] sm:$0xff]
    %v142 = vld [vmem:[#allocation4 + $0x80] sm:$0xff]
    %v143 = vld [vmem:[#allocation4 + $0x88] sm:$0xff]
    %v144 = vld [vmem:[#allocation4 + $0x90] sm:$0xff]
    %v145 = vld [vmem:[#allocation4 + $0x98] sm:$0xff]
    %v146 = vld [vmem:[#allocation4 + $0xa0] sm:$0xff]
    %v147 = vld [vmem:[#allocation4 + $0xa8] sm:$0xff]
    %v148 = vld [vmem:[#allocation4 + $0xb0] sm:$0xff]
    %v149 = vld [vmem:[#allocation4 + $0xb8] sm:$0xff]
    %v150 = vld [vmem:[#allocation4 + $0xc0] sm:$0xff]
    %v151 = vld [vmem:[#allocation4 + $0xc8] sm:$0xff]
    %s152 = scalar_lea.vmem [#allocation4], 208
    %v153 = vld [vmem:[%s152] ss:$8 sm:$0x3]
    %v155 = vlaneseq
    %v156 = vshrl.u32 %v155, 7
    %v157 = vsub.s32 0, %v156
    %v158 = vrot.slane %v153, %v157
    %v159 = vlaneseq
    %v160 = vshrl.u32 %v159, 7
    %v161 = vsub.s32 1, %v160
    %v162 = vrot.slane %v153, %v161
    %vm165 = vcmask 523264
    %v167 = vsel %vm165, %v135, 0
    %169 = vmatprep.subr.mxu0 %v137
    %170 = vmatpush1.msra.mxu0 %v136
    %171 = vmatprep.subr.mxu0 %v139
    %172 = vmatpush1.msra.mxu0 %v138
    %173 = vmatprep.subr.mxu0 %v141
    %174 = vmatpush1.msra.mxu0 %v140
    %175 = vmatprep.subr.mxu0 %v143
    %176 = vmatpush1.msra.mxu0 %v142
    %177 = vmatprep.subr.mxu0 %v145
    %178 = vmatpush1.msra.mxu0 %v144
    %179 = vmatprep.subr.mxu0 %v147
    %180 = vmatpush1.msra.mxu0 %v146
    %181 = vmatprep.subr.mxu0 %v149
    %182 = vmatpush1.msra.mxu0 %v148
    %183 = vmatprep.subr.mxu0 %v151
    %184 = vmatpush1.msra.mxu0 %v150
    %185 = vmatprep.subr.mxu0 0.0
    %186 = vmatpush1.msra.mxu0 0.0
    %187 = vmatprep.subr.mxu0 0.0
    %188 = vmatpush1.msra.mxu0 0.0
    %189 = vmatprep.subr.mxu0 0.0
    %190 = vmatpush1.msra.mxu0 0.0
    %191 = vmatprep.subr.mxu0 0.0
    %192 = vmatpush1.msra.mxu0 0.0
    %193 = vmatprep.subr.mxu0 0.0
    %194 = vmatpush1.msra.mxu0 0.0
    %195 = vmatprep.subr.mxu0 0.0
    %196 = vmatpush1.msra.mxu0 0.0
    %197 = vmatprep.subr.mxu0 0.0
    %198 = vmatpush1.msra.mxu0 0.0
    %199 = vmatprep.subr.mxu0 0.0
    %200 = vmatpush1.msra.mxu0 0.0
    %201 = vmatprep.subr.mxu0 0.0
    %202 = vmatpush1.msra.mxu0 0.0
    %203 = vmatprep.subr.mxu0 0.0
    %204 = vmatpush1.msra.mxu0 0.0
    %205 = vmatprep.subr.mxu0 0.0
    %206 = vmatpush1.msra.mxu0 0.0
    %207 = vmatprep.subr.mxu0 0.0
    %208 = vmatpush1.msra.mxu0 0.0
    %209 = vmatprep.subr.mxu0 0.0
    %210 = vmatpush1.msra.mxu0 0.0
    %211 = vmatprep.subr.mxu0 0.0
    %212 = vmatpush1.msra.mxu0 0.0
    %213 = vmatprep.subr.mxu0 0.0
    %214 = vmatpush1.msra.mxu0 0.0
    %215 = vmatprep.subr.mxu0 0.0
    %216 = vmatpush1.msra.mxu0 0.0
    %217 = vmatprep.subr.mxu0 0.0
    %218 = vmatpush1.msra.mxu0 0.0
    %219 = vmatprep.subr.mxu0 0.0
    %220 = vmatpush1.msra.mxu0 0.0
    %221 = vmatprep.subr.mxu0 0.0
    %222 = vmatpush1.msra.mxu0 0.0
    %223 = vmatprep.subr.mxu0 0.0
    %224 = vmatpush1.msra.mxu0 0.0
    %225 = vmatprep.subr.mxu0 0.0
    %226 = vmatpush1.msra.mxu0 0.0
    %227 = vmatprep.subr.mxu0 0.0
    %228 = vmatpush1.msra.mxu0 0.0
    %229 = vmatprep.subr.mxu0 0.0
    %230 = vmatpush1.msra.mxu0 0.0
    %231 = vmatprep.subr.mxu0 0.0
    %232 = vmatpush1.msra.mxu0 0.0
    %233 = vmatprep.mubr.f32.mxu0 0.0
    %234 = vmatmul.mubr.f32.gmra.mrb[0].mxu0 %v167
    %v235 = vpop.f32.mrb[0].mxu0
    %v236 = vadd.f32 %v158, %v235
    %v237 = vpop.f32.mrb[0].mxu0
    %v238 = vadd.f32 %v162, %v237
    %239 = vdwg.mxu0
    %v240 = vmul.f32 %v236, %v236
    %v241 = vmul.f32 %v238, %v238
    %s242 = scalar_lea.vmem [#allocation6], 4096
    %v243 = vld [vmem:[%s242] sm:$0xff]
    %v244 = vld [vmem:[%s242 + $0x8] sm:$0xff]
    %v245 = vld [vmem:[%s242 + $0x10] sm:$0xff]
    %v246 = vld [vmem:[%s242 + $0x18] sm:$0xff]
    %v247 = vld [vmem:[%s242 + $0x20] sm:$0xff]
    %v248 = vld [vmem:[%s242 + $0x28] sm:$0xff]
    %v249 = vld [vmem:[%s242 + $0x30] sm:$0xff]
    %v250 = vld [vmem:[%s242 + $0x38] sm:$0xff]
    %v251 = vld [vmem:[%s242 + $0x40] sm:$0xff]
    %v252 = vld [vmem:[%s242 + $0x48] sm:$0xff]
    %v253 = vld [vmem:[%s242 + $0x50] sm:$0xff]
    %v254 = vld [vmem:[%s242 + $0x58] sm:$0xff]
    %v255 = vld [vmem:[%s242 + $0x60] sm:$0xff]
    %v256 = vld [vmem:[%s242 + $0x68] sm:$0xff]
    %v257 = vld [vmem:[%s242 + $0x70] sm:$0xff]
    %v258 = vld [vmem:[%s242 + $0x78] sm:$0xff]
    %v259 = vld [vmem:[%s242 + $0x80] sm:$0xff]
    %v260 = vld [vmem:[%s242 + $0x88] sm:$0xff]
    %v261 = vld [vmem:[%s242 + $0x90] sm:$0xff]
    %v262 = vld [vmem:[%s242 + $0x98] sm:$0xff]
    %v263 = vld [vmem:[%s242 + $0xa0] sm:$0xff]
    %v264 = vld [vmem:[%s242 + $0xa8] sm:$0xff]
    %v265 = vld [vmem:[%s242 + $0xb0] sm:$0xff]
    %v266 = vld [vmem:[%s242 + $0xb8] sm:$0xff]
    %v267 = vld [vmem:[%s242 + $0xc0] sm:$0xff]
    %v268 = vld [vmem:[%s242 + $0xc8] sm:$0xff]
    %v269 = vld [vmem:[%s242 + $0xd0] sm:$0xff]
    %v270 = vld [vmem:[%s242 + $0xd8] sm:$0xff]
    %v271 = vld [vmem:[%s242 + $0xe0] sm:$0xff]
    %v272 = vld [vmem:[%s242 + $0xe8] sm:$0xff]
    %v273 = vld [vmem:[%s242 + $0xf0] sm:$0xff]
    %v274 = vld [vmem:[%s242 + $0xf8] sm:$0xff]
    %v275 = vld [vmem:[%s242 + $0x100] sm:$0xff]
    %v276 = vld [vmem:[%s242 + $0x108] sm:$0xff]
    %v277 = vld [vmem:[%s242 + $0x110] sm:$0xff]
    %v278 = vld [vmem:[%s242 + $0x118] sm:$0xff]
    %v279 = vld [vmem:[%s242 + $0x120] sm:$0xff]
    %v280 = vld [vmem:[%s242 + $0x128] sm:$0xff]
    %v281 = vld [vmem:[%s242 + $0x130] sm:$0xff]
    %v282 = vld [vmem:[%s242 + $0x138] sm:$0xff]
    %v283 = vld [vmem:[%s242 + $0x140] sm:$0xff]
    %v284 = vld [vmem:[%s242 + $0x148] sm:$0xff]
    %v285 = vld [vmem:[%s242 + $0x150] sm:$0xff]
    %v286 = vld [vmem:[%s242 + $0x158] sm:$0xff]
    %v287 = vld [vmem:[%s242 + $0x160] sm:$0xff]
    %v288 = vld [vmem:[%s242 + $0x168] sm:$0xff]
    %v289 = vld [vmem:[%s242 + $0x170] sm:$0xff]
    %v290 = vld [vmem:[%s242 + $0x178] sm:$0xff]
    %v291 = vld [vmem:[%s242 + $0x180] sm:$0xff]
    %v292 = vld [vmem:[%s242 + $0x188] sm:$0xff]
    %v293 = vld [vmem:[%s242 + $0x190] sm:$0xff]
    %v294 = vld [vmem:[%s242 + $0x198] sm:$0xff]
    %v295 = vld [vmem:[%s242 + $0x1a0] sm:$0xff]
    %v296 = vld [vmem:[%s242 + $0x1a8] sm:$0xff]
    %v297 = vld [vmem:[%s242 + $0x1b0] sm:$0xff]
    %v298 = vld [vmem:[%s242 + $0x1b8] sm:$0xff]
    %v299 = vld [vmem:[%s242 + $0x1c0] sm:$0xff]
    %v300 = vld [vmem:[%s242 + $0x1c8] sm:$0xff]
    %v301 = vld [vmem:[%s242 + $0x1d0] sm:$0xff]
    %v302 = vld [vmem:[%s242 + $0x1d8] sm:$0xff]
    %v303 = vld [vmem:[%s242 + $0x1e0] sm:$0xff]
    %v304 = vld [vmem:[%s242 + $0x1e8] sm:$0xff]
    %v305 = vld [vmem:[%s242 + $0x1f0] sm:$0xff]
    %v306 = vld [vmem:[%s242 + $0x1f8] sm:$0xff]
    %307 = vmatprep.subr.mxu0 %v244
    %308 = vmatpush1.msra.mxu0 %v243
    %309 = vmatprep.subr.mxu0 %v246
    %310 = vmatpush1.msra.mxu0 %v245
    %311 = vmatprep.subr.mxu0 %v248
    %312 = vmatpush1.msra.mxu0 %v247
    %313 = vmatprep.subr.mxu0 %v250
    %314 = vmatpush1.msra.mxu0 %v249
    %315 = vmatprep.subr.mxu0 %v252
    %316 = vmatpush1.msra.mxu0 %v251
    %317 = vmatprep.subr.mxu0 %v254
    %318 = vmatpush1.msra.mxu0 %v253
    %319 = vmatprep.subr.mxu0 %v256
    %320 = vmatpush1.msra.mxu0 %v255
    %321 = vmatprep.subr.mxu0 %v258
    %322 = vmatpush1.msra.mxu0 %v257
    %323 = vmatprep.subr.mxu0 %v260
    %324 = vmatpush1.msra.mxu0 %v259
    %325 = vmatprep.subr.mxu0 %v262
    %326 = vmatpush1.msra.mxu0 %v261
    %327 = vmatprep.subr.mxu0 %v264
    %328 = vmatpush1.msra.mxu0 %v263
    %329 = vmatprep.subr.mxu0 %v266
    %330 = vmatpush1.msra.mxu0 %v265
    %331 = vmatprep.subr.mxu0 %v268
    %332 = vmatpush1.msra.mxu0 %v267
    %333 = vmatprep.subr.mxu0 %v270
    %334 = vmatpush1.msra.mxu0 %v269
    %335 = vmatprep.subr.mxu0 %v272
    %336 = vmatpush1.msra.mxu0 %v271
    %337 = vmatprep.subr.mxu0 %v274
    %338 = vmatpush1.msra.mxu0 %v273
    %339 = vmatprep.subr.mxu0 %v276
    %340 = vmatpush1.msra.mxu0 %v275
    %341 = vmatprep.subr.mxu0 %v278
    %342 = vmatpush1.msra.mxu0 %v277
    %343 = vmatprep.subr.mxu0 %v280
    %344 = vmatpush1.msra.mxu0 %v279
    %345 = vmatprep.subr.mxu0 %v282
    %346 = vmatpush1.msra.mxu0 %v281
    %347 = vmatprep.subr.mxu0 %v284
    %348 = vmatpush1.msra.mxu0 %v283
    %349 = vmatprep.subr.mxu0 %v286
    %350 = vmatpush1.msra.mxu0 %v285
    %351 = vmatprep.subr.mxu0 %v288
    %352 = vmatpush1.msra.mxu0 %v287
    %353 = vmatprep.subr.mxu0 %v290
    %354 = vmatpush1.msra.mxu0 %v289
    %355 = vmatprep.subr.mxu0 %v292
    %356 = vmatpush1.msra.mxu0 %v291
    %357 = vmatprep.subr.mxu0 %v294
    %358 = vmatpush1.msra.mxu0 %v293
    %359 = vmatprep.subr.mxu0 %v296
    %360 = vmatpush1.msra.mxu0 %v295
    %361 = vmatprep.subr.mxu0 %v298
    %362 = vmatpush1.msra.mxu0 %v297
    %363 = vmatprep.subr.mxu0 %v300
    %364 = vmatpush1.msra.mxu0 %v299
    %365 = vmatprep.subr.mxu0 %v302
    %366 = vmatpush1.msra.mxu0 %v301
    %367 = vmatprep.subr.mxu0 %v304
    %368 = vmatpush1.msra.mxu0 %v303
    %369 = vmatprep.subr.mxu0 %v306
    %370 = vmatpush1.msra.mxu0 %v305
    %371 = vmatprep.mubr.f32.mxu0 %v241
    %372 = vmatmul.mubr.f32.gmra.mrb[0].mxu0 %v240
    %v373 = vpop.f32.mrb[0].mxu0
    %v374 = vadd.f32 0.0, %v373
    %v375 = vpop.f32.mrb[0].mxu0
    %v376 = vadd.f32 0.0, %v375
    %377 = vdwg.mxu0
    %v378 = vmul.f32 %v374, 0.03125
    %v379 = vmul.f32 %v376, 0.03125
    %v380 = vadd.f32 %v378, 1e-08
    %v381 = vadd.f32 %v379, 1e-08
    %v382 = vrsqrt.pop %v380
    %v383 = vrsqrt.pop %v381
    %v384 = vmul.f32 %v236, %v382
    %v385 = vmul.f32 %v238, %v383
    %s386 = scalar_lea.vmem [#allocation4], 224
    %v387 = vld [vmem:[%s386] ss:$8 sm:$0x3]
    %v388 = vld [vmem:[#allocation6] sm:$0xff]
    %v389 = vld [vmem:[#allocation6 + $0x8] sm:$0xff]
    %v390 = vld [vmem:[#allocation6 + $0x10] sm:$0xff]
    %v391 = vld [vmem:[#allocation6 + $0x18] sm:$0xff]
    %v392 = vld [vmem:[#allocation6 + $0x20] sm:$0xff]
    %v393 = vld [vmem:[#allocation6 + $0x28] sm:$0xff]
    %v394 = vld [vmem:[#allocation6 + $0x30] sm:$0xff]
    %v395 = vld [vmem:[#allocation6 + $0x38] sm:$0xff]
    %v396 = vld [vmem:[#allocation6 + $0x40] sm:$0xff]
    %v397 = vld [vmem:[#allocation6 + $0x48] sm:$0xff]
    %v398 = vld [vmem:[#allocation6 + $0x50] sm:$0xff]
    %v399 = vld [vmem:[#allocation6 + $0x58] sm:$0xff]
    %v400 = vld [vmem:[#allocation6 + $0x60] sm:$0xff]
    %v401 = vld [vmem:[#allocation6 + $0x68] sm:$0xff]
    %v402 = vld [vmem:[#allocation6 + $0x70] sm:$0xff]
    %v403 = vld [vmem:[#allocation6 + $0x78] sm:$0xff]
    %v404 = vld [vmem:[#allocation6 + $0x80] sm:$0xff]
    %v405 = vld [vmem:[#allocation6 + $0x88] sm:$0xff]
    %v406 = vld [vmem:[#allocation6 + $0x90] sm:$0xff]
    %v407 = vld [vmem:[#allocation6 + $0x98] sm:$0xff]
    %v408 = vld [vmem:[#allocation6 + $0xa0] sm:$0xff]
    %v409 = vld [vmem:[#allocation6 + $0xa8] sm:$0xff]
    %v410 = vld [vmem:[#allocation6 + $0xb0] sm:$0xff]
    %v411 = vld [vmem:[#allocation6 + $0xb8] sm:$0xff]
    %v412 = vld [vmem:[#allocation6 + $0xc0] sm:$0xff]
    %v413 = vld [vmem:[#allocation6 + $0xc8] sm:$0xff]
    %v414 = vld [vmem:[#allocation6 + $0xd0] sm:$0xff]
    %v415 = vld [vmem:[#allocation6 + $0xd8] sm:$0xff]
    %v416 = vld [vmem:[#allocation6 + $0xe0] sm:$0xff]
    %v417 = vld [vmem:[#allocation6 + $0xe8] sm:$0xff]
    %v418 = vld [vmem:[#allocation6 + $0xf0] sm:$0xff]
    %v419 = vld [vmem:[#allocation6 + $0xf8] sm:$0xff]
    %v420 = vld [vmem:[#allocation6 + $0x100] sm:$0xff]
    %v421 = vld [vmem:[#allocation6 + $0x108] sm:$0xff]
    %v422 = vld [vmem:[#allocation6 + $0x110] sm:$0xff]
    %v423 = vld [vmem:[#allocation6 + $0x118] sm:$0xff]
    %v424 = vld [vmem:[#allocation6 + $0x120] sm:$0xff]
    %v425 = vld [vmem:[#allocation6 + $0x128] sm:$0xff]
    %v426 = vld [vmem:[#allocation6 + $0x130] sm:$0xff]
    %v427 = vld [vmem:[#allocation6 + $0x138] sm:$0xff]
    %v428 = vld [vmem:[#allocation6 + $0x140] sm:$0xff]
    %v429 = vld [vmem:[#allocation6 + $0x148] sm:$0xff]
    %v430 = vld [vmem:[#allocation6 + $0x150] sm:$0xff]
    %v431 = vld [vmem:[#allocation6 + $0x158] sm:$0xff]
    %v432 = vld [vmem:[#allocation6 + $0x160] sm:$0xff]
    %v433 = vld [vmem:[#allocation6 + $0x168] sm:$0xff]
    %v434 = vld [vmem:[#allocation6 + $0x170] sm:$0xff]
    %v435 = vld [vmem:[#allocation6 + $0x178] sm:$0xff]
    %v436 = vld [vmem:[#allocation6 + $0x180] sm:$0xff]
    %v437 = vld [vmem:[#allocation6 + $0x188] sm:$0xff]
    %v438 = vld [vmem:[#allocation6 + $0x190] sm:$0xff]
    %v439 = vld [vmem:[#allocation6 + $0x198] sm:$0xff]
    %v440 = vld [vmem:[#allocation6 + $0x1a0] sm:$0xff]
    %v441 = vld [vmem:[#allocation6 + $0x1a8] sm:$0xff]
    %v442 = vld [vmem:[#allocation6 + $0x1b0] sm:$0xff]
    %v443 = vld [vmem:[#allocation6 + $0x1b8] sm:$0xff]
    %v444 = vld [vmem:[#allocation6 + $0x1c0] sm:$0xff]
    %v445 = vld [vmem:[#allocation6 + $0x1c8] sm:$0xff]
    %v446 = vld [vmem:[#allocation6 + $0x1d0] sm:$0xff]
    %v447 = vld [vmem:[#allocation6 + $0x1d8] sm:$0xff]
    %v448 = vld [vmem:[#allocation6 + $0x1e0] sm:$0xff]
    %v449 = vld [vmem:[#allocation6 + $0x1e8] sm:$0xff]
    %v450 = vld [vmem:[#allocation6 + $0x1f0] sm:$0xff]
    %v451 = vld [vmem:[#allocation6 + $0x1f8] sm:$0xff]
    %v453 = vlaneseq
    %v454 = vshrl.u32 %v453, 7
    %v455 = vsub.s32 0, %v454
    %v456 = vrot.slane %v387, %v455
    %v457 = vlaneseq
    %v458 = vshrl.u32 %v457, 7
    %v459 = vsub.s32 1, %v458
    %v460 = vrot.slane %v387, %v459
    %463 = vmatprep.subr.mxu0 %v389
    %464 = vmatpush1.msra.mxu0 %v388
    %465 = vmatprep.subr.mxu0 %v391
    %466 = vmatpush1.msra.mxu0 %v390
    %467 = vmatprep.subr.mxu0 %v393
    %468 = vmatpush1.msra.mxu0 %v392
    %469 = vmatprep.subr.mxu0 %v395
    %470 = vmatpush1.msra.mxu0 %v394
    %471 = vmatprep.subr.mxu0 %v397
    %472 = vmatpush1.msra.mxu0 %v396
    %473 = vmatprep.subr.mxu0 %v399
    %474 = vmatpush1.msra.mxu0 %v398
    %475 = vmatprep.subr.mxu0 %v401
    %476 = vmatpush1.msra.mxu0 %v400
    %477 = vmatprep.subr.mxu0 %v403
    %478 = vmatpush1.msra.mxu0 %v402
    %479 = vmatprep.subr.mxu0 %v405
    %480 = vmatpush1.msra.mxu0 %v404
    %481 = vmatprep.subr.mxu0 %v407
    %482 = vmatpush1.msra.mxu0 %v406
    %483 = vmatprep.subr.mxu0 %v409
    %484 = vmatpush1.msra.mxu0 %v408
    %485 = vmatprep.subr.mxu0 %v411
    %486 = vmatpush1.msra.mxu0 %v410
    %487 = vmatprep.subr.mxu0 %v413
    %488 = vmatpush1.msra.mxu0 %v412
    %489 = vmatprep.subr.mxu0 %v415
    %490 = vmatpush1.msra.mxu0 %v414
    %491 = vmatprep.subr.mxu0 %v417
    %492 = vmatpush1.msra.mxu0 %v416
    %493 = vmatprep.subr.mxu0 %v419
    %494 = vmatpush1.msra.mxu0 %v418
    %495 = vmatprep.subr.mxu0 %v421
    %496 = vmatpush1.msra.mxu0 %v420
    %497 = vmatprep.subr.mxu0 %v423
    %498 = vmatpush1.msra.mxu0 %v422
    %499 = vmatprep.subr.mxu0 %v425
    %500 = vmatpush1.msra.mxu0 %v424
    %501 = vmatprep.subr.mxu0 %v427
    %502 = vmatpush1.msra.mxu0 %v426
    %503 = vmatprep.subr.mxu0 %v429
    %504 = vmatpush1.msra.mxu0 %v428
    %505 = vmatprep.subr.mxu0 %v431
    %506 = vmatpush1.msra.mxu0 %v430
    %507 = vmatprep.subr.mxu0 %v433
    %508 = vmatpush1.msra.mxu0 %v432
    %509 = vmatprep.subr.mxu0 %v435
    %510 = vmatpush1.msra.mxu0 %v434
    %511 = vmatprep.subr.mxu0 %v437
    %512 = vmatpush1.msra.mxu0 %v436
    %513 = vmatprep.subr.mxu0 %v439
    %514 = vmatpush1.msra.mxu0 %v438
    %515 = vmatprep.subr.mxu0 %v441
    %516 = vmatpush1.msra.mxu0 %v440
    %517 = vmatprep.subr.mxu0 %v443
    %518 = vmatpush1.msra.mxu0 %v442
    %519 = vmatprep.subr.mxu0 %v445
    %520 = vmatpush1.msra.mxu0 %v444
    %521 = vmatprep.subr.mxu0 %v447
    %522 = vmatpush1.msra.mxu0 %v446
    %523 = vmatprep.subr.mxu0 %v449
    %524 = vmatpush1.msra.mxu0 %v448
    %525 = vmatprep.subr.mxu0 %v451
    %526 = vmatpush1.msra.mxu0 %v450
    %527 = vmatprep.mubr.f32.mxu0 %v385
    %528 = vmatmul.mubr.f32.gmra.mrb[0].mxu0 %v384
    %v529 = vpop.f32.mrb[0].mxu0
    %v530 = vadd.f32 %v456, %v529
    %v531 = vpop.f32.mrb[0].mxu0
    %v532 = vadd.f32 %v460, %v531
    %533 = vdwg.mxu0
    %vm534 = vcmp.ge.f32.partialorder %v530, 0.0
    %vm535 = vcmp.ge.f32.partialorder %v532, 0.0
    %v536 = vsel %vm534, 1.4142135, 0.28284273
    %v537 = vsel %vm535, 1.4142135, 0.28284273
    %v538 = vmul.f32 %v530, %v536
    %v539 = vmul.f32 %v532, %v537
    %s540 = scalar_lea.vmem [#allocation4], 225
    %v541 = vld [vmem:[%s540] ss:$8 sm:$0x3]
    %s542 = scalar_lea.vmem [#allocation6], 512
    %v543 = vld [vmem:[%s542] sm:$0xff]
    %v544 = vld [vmem:[%s542 + $0x8] sm:$0xff]
    %v545 = vld [vmem:[%s542 + $0x10] sm:$0xff]
    %v546 = vld [vmem:[%s542 + $0x18] sm:$0xff]
    %v547 = vld [vmem:[%s542 + $0x20] sm:$0xff]
    %v548 = vld [vmem:[%s542 + $0x28] sm:$0xff]
    %v549 = vld [vmem:[%s542 + $0x30] sm:$0xff]
    %v550 = vld [vmem:[%s542 + $0x38] sm:$0xff]
    %v551 = vld [vmem:[%s542 + $0x40] sm:$0xff]
    %v552 = vld [vmem:[%s542 + $0x48] sm:$0xff]
    %v553 = vld [vmem:[%s542 + $0x50] sm:$0xff]
    %v554 = vld [vmem:[%s542 + $0x58] sm:$0xff]
    %v555 = vld [vmem:[%s542 + $0x60] sm:$0xff]
    %v556 = vld [vmem:[%s542 + $0x68] sm:$0xff]
    %v557 = vld [vmem:[%s542 + $0x70] sm:$0xff]
    %v558 = vld [vmem:[%s542 + $0x78] sm:$0xff]
    %v559 = vld [vmem:[%s542 + $0x80] sm:$0xff]
    %v560 = vld [vmem:[%s542 + $0x88] sm:$0xff]
    %v561 = vld [vmem:[%s542 + $0x90] sm:$0xff]
    %v562 = vld [vmem:[%s542 + $0x98] sm:$0xff]
    %v563 = vld [vmem:[%s542 + $0xa0] sm:$0xff]
    %v564 = vld [vmem:[%s542 + $0xa8] sm:$0xff]
    %v565 = vld [vmem:[%s542 + $0xb0] sm:$0xff]
    %v566 = vld [vmem:[%s542 + $0xb8] sm:$0xff]
    %v567 = vld [vmem:[%s542 + $0xc0] sm:$0xff]
    %v568 = vld [vmem:[%s542 + $0xc8] sm:$0xff]
    %v569 = vld [vmem:[%s542 + $0xd0] sm:$0xff]
    %v570 = vld [vmem:[%s542 + $0xd8] sm:$0xff]
    %v571 = vld [vmem:[%s542 + $0xe0] sm:$0xff]
    %v572 = vld [vmem:[%s542 + $0xe8] sm:$0xff]
    %v573 = vld [vmem:[%s542 + $0xf0] sm:$0xff]
    %v574 = vld [vmem:[%s542 + $0xf8] sm:$0xff]
    %v575 = vld [vmem:[%s542 + $0x100] sm:$0xff]
    %v576 = vld [vmem:[%s542 + $0x108] sm:$0xff]
    %v577 = vld [vmem:[%s542 + $0x110] sm:$0xff]
    %v578 = vld [vmem:[%s542 + $0x118] sm:$0xff]
    %v579 = vld [vmem:[%s542 + $0x120] sm:$0xff]
    %v580 = vld [vmem:[%s542 + $0x128] sm:$0xff]
    %v581 = vld [vmem:[%s542 + $0x130] sm:$0xff]
    %v582 = vld [vmem:[%s542 + $0x138] sm:$0xff]
    %v583 = vld [vmem:[%s542 + $0x140] sm:$0xff]
    %v584 = vld [vmem:[%s542 + $0x148] sm:$0xff]
    %v585 = vld [vmem:[%s542 + $0x150] sm:$0xff]
    %v586 = vld [vmem:[%s542 + $0x158] sm:$0xff]
    %v587 = vld [vmem:[%s542 + $0x160] sm:$0xff]
    %v588 = vld [vmem:[%s542 + $0x168] sm:$0xff]
    %v589 = vld [vmem:[%s542 + $0x170] sm:$0xff]
    %v590 = vld [vmem:[%s542 + $0x178] sm:$0xff]
    %v591 = vld [vmem:[%s542 + $0x180] sm:$0xff]
    %v592 = vld [vmem:[%s542 + $0x188] sm:$0xff]
    %v593 = vld [vmem:[%s542 + $0x190] sm:$0xff]
    %v594 = vld [vmem:[%s542 + $0x198] sm:$0xff]
    %v595 = vld [vmem:[%s542 + $0x1a0] sm:$0xff]
    %v596 = vld [vmem:[%s542 + $0x1a8] sm:$0xff]
    %v597 = vld [vmem:[%s542 + $0x1b0] sm:$0xff]
    %v598 = vld [vmem:[%s542 + $0x1b8] sm:$0xff]
    %v599 = vld [vmem:[%s542 + $0x1c0] sm:$0xff]
    %v600 = vld [vmem:[%s542 + $0x1c8] sm:$0xff]
    %v601 = vld [vmem:[%s542 + $0x1d0] sm:$0xff]
    %v602 = vld [vmem:[%s542 + $0x1d8] sm:$0xff]
    %v603 = vld [vmem:[%s542 + $0x1e0] sm:$0xff]
    %v604 = vld [vmem:[%s542 + $0x1e8] sm:$0xff]
    %v605 = vld [vmem:[%s542 + $0x1f0] sm:$0xff]
    %v606 = vld [vmem:[%s542 + $0x1f8] sm:$0xff]
    %v608 = vlaneseq
    %v609 = vshrl.u32 %v608, 7
    %v610 = vsub.s32 0, %v609
    %v611 = vrot.slane %v541, %v610
    %v612 = vlaneseq
    %v613 = vshrl.u32 %v612, 7
    %v614 = vsub.s32 1, %v613
    %v615 = vrot.slane %v541, %v614
    %618 = vmatprep.subr.mxu0 %v544
    %619 = vmatpush1.msra.mxu0 %v543
    %620 = vmatprep.subr.mxu0 %v546
    %621 = vmatpush1.msra.mxu0 %v545
    %622 = vmatprep.subr.mxu0 %v548
    %623 = vmatpush1.msra.mxu0 %v547
    %624 = vmatprep.subr.mxu0 %v550
    %625 = vmatpush1.msra.mxu0 %v549
    %626 = vmatprep.subr.mxu0 %v552
    %627 = vmatpush1.msra.mxu0 %v551
    %628 = vmatprep.subr.mxu0 %v554
    %629 = vmatpush1.msra.mxu0 %v553
    %630 = vmatprep.subr.mxu0 %v556
    %631 = vmatpush1.msra.mxu0 %v555
    %632 = vmatprep.subr.mxu0 %v558
    %633 = vmatpush1.msra.mxu0 %v557
    %634 = vmatprep.subr.mxu0 %v560
    %635 = vmatpush1.msra.mxu0 %v559
    %636 = vmatprep.subr.mxu0 %v562
    %637 = vmatpush1.msra.mxu0 %v561
    %638 = vmatprep.subr.mxu0 %v564
    %639 = vmatpush1.msra.mxu0 %v563
    %640 = vmatprep.subr.mxu0 %v566
    %641 = vmatpush1.msra.mxu0 %v565
    %642 = vmatprep.subr.mxu0 %v568
    %643 = vmatpush1.msra.mxu0 %v567
    %644 = vmatprep.subr.mxu0 %v570
    %645 = vmatpush1.msra.mxu0 %v569
    %646 = vmatprep.subr.mxu0 %v572
    %647 = vmatpush1.msra.mxu0 %v571
    %648 = vmatprep.subr.mxu0 %v574
    %649 = vmatpush1.msra.mxu0 %v573
    %650 = vmatprep.subr.mxu0 %v576
    %651 = vmatpush1.msra.mxu0 %v575
    %652 = vmatprep.subr.mxu0 %v578
    %653 = vmatpush1.msra.mxu0 %v577
    %654 = vmatprep.subr.mxu0 %v580
    %655 = vmatpush1.msra.mxu0 %v579
    %656 = vmatprep.subr.mxu0 %v582
    %657 = vmatpush1.msra.mxu0 %v581
    %658 = vmatprep.subr.mxu0 %v584
    %659 = vmatpush1.msra.mxu0 %v583
    %660 = vmatprep.subr.mxu0 %v586
    %661 = vmatpush1.msra.mxu0 %v585
    %662 = vmatprep.subr.mxu0 %v588
    %663 = vmatpush1.msra.mxu0 %v587
    %664 = vmatprep.subr.mxu0 %v590
    %665 = vmatpush1.msra.mxu0 %v589
    %666 = vmatprep.subr.mxu0 %v592
    %667 = vmatpush1.msra.mxu0 %v591
    %668 = vmatprep.subr.mxu0 %v594
    %669 = vmatpush1.msra.mxu0 %v593
    %670 = vmatprep.subr.mxu0 %v596
    %671 = vmatpush1.msra.mxu0 %v595
    %672 = vmatprep.subr.mxu0 %v598
    %673 = vmatpush1.msra.mxu0 %v597
    %674 = vmatprep.subr.mxu0 %v600
    %675 = vmatpush1.msra.mxu0 %v599
    %676 = vmatprep.subr.mxu0 %v602
    %677 = vmatpush1.msra.mxu0 %v601
    %678 = vmatprep.subr.mxu0 %v604
    %679 = vmatpush1.msra.mxu0 %v603
    %680 = vmatprep.subr.mxu0 %v606
    %681 = vmatpush1.msra.mxu0 %v605
    %682 = vmatprep.mubr.f32.mxu0 %v539
    %683 = vmatmul.mubr.f32.gmra.mrb[0].mxu0 %v538
    %v684 = vpop.f32.mrb[0].mxu0
    %v685 = vadd.f32 %v611, %v684
    %v686 = vpop.f32.mrb[0].mxu0
    %v687 = vadd.f32 %v615, %v686
    %688 = vdwg.mxu0
    %vm689 = vcmp.ge.f32.partialorder %v685, 0.0
    %vm690 = vcmp.ge.f32.partialorder %v687, 0.0
    %v691 = vsel %vm689, 1.4142135, 0.28284273
    %v692 = vsel %vm690, 1.4142135, 0.28284273
    %v693 = vmul.f32 %v685, %v691
    %v694 = vmul.f32 %v687, %v692
    %s695 = scalar_lea.vmem [#allocation4], 226
    %v696 = vld [vmem:[%s695] ss:$8 sm:$0x3]
    %s697 = scalar_lea.vmem [#allocation6], 1024
    %v698 = vld [vmem:[%s697] sm:$0xff]
    %v699 = vld [vmem:[%s697 + $0x8] sm:$0xff]
    %v700 = vld [vmem:[%s697 + $0x10] sm:$0xff]
    %v701 = vld [vmem:[%s697 + $0x18] sm:$0xff]
    %v702 = vld [vmem:[%s697 + $0x20] sm:$0xff]
    %v703 = vld [vmem:[%s697 + $0x28] sm:$0xff]
    %v704 = vld [vmem:[%s697 + $0x30] sm:$0xff]
    %v705 = vld [vmem:[%s697 + $0x38] sm:$0xff]
    %v706 = vld [vmem:[%s697 + $0x40] sm:$0xff]
    %v707 = vld [vmem:[%s697 + $0x48] sm:$0xff]
    %v708 = vld [vmem:[%s697 + $0x50] sm:$0xff]
    %v709 = vld [vmem:[%s697 + $0x58] sm:$0xff]
    %v710 = vld [vmem:[%s697 + $0x60] sm:$0xff]
    %v711 = vld [vmem:[%s697 + $0x68] sm:$0xff]
    %v712 = vld [vmem:[%s697 + $0x70] sm:$0xff]
    %v713 = vld [vmem:[%s697 + $0x78] sm:$0xff]
    %v714 = vld [vmem:[%s697 + $0x80] sm:$0xff]
    %v715 = vld [vmem:[%s697 + $0x88] sm:$0xff]
    %v716 = vld [vmem:[%s697 + $0x90] sm:$0xff]
    %v717 = vld [vmem:[%s697 + $0x98] sm:$0xff]
    %v718 = vld [vmem:[%s697 + $0xa0] sm:$0xff]
    %v719 = vld [vmem:[%s697 + $0xa8] sm:$0xff]
    %v720 = vld [vmem:[%s697 + $0xb0] sm:$0xff]
    %v721 = vld [vmem:[%s697 + $0xb8] sm:$0xff]
    %v722 = vld [vmem:[%s697 + $0xc0] sm:$0xff]
    %v723 = vld [vmem:[%s697 + $0xc8] sm:$0xff]
    %v724 = vld [vmem:[%s697 + $0xd0] sm:$0xff]
    %v725 = vld [vmem:[%s697 + $0xd8] sm:$0xff]
    %v726 = vld [vmem:[%s697 + $0xe0] sm:$0xff]
    %v727 = vld [vmem:[%s697 + $0xe8] sm:$0xff]
    %v728 = vld [vmem:[%s697 + $0xf0] sm:$0xff]
    %v729 = vld [vmem:[%s697 + $0xf8] sm:$0xff]
    %v730 = vld [vmem:[%s697 + $0x100] sm:$0xff]
    %v731 = vld [vmem:[%s697 + $0x108] sm:$0xff]
    %v732 = vld [vmem:[%s697 + $0x110] sm:$0xff]
    %v733 = vld [vmem:[%s697 + $0x118] sm:$0xff]
    %v734 = vld [vmem:[%s697 + $0x120] sm:$0xff]
    %v735 = vld [vmem:[%s697 + $0x128] sm:$0xff]
    %v736 = vld [vmem:[%s697 + $0x130] sm:$0xff]
    %v737 = vld [vmem:[%s697 + $0x138] sm:$0xff]
    %v738 = vld [vmem:[%s697 + $0x140] sm:$0xff]
    %v739 = vld [vmem:[%s697 + $0x148] sm:$0xff]
    %v740 = vld [vmem:[%s697 + $0x150] sm:$0xff]
    %v741 = vld [vmem:[%s697 + $0x158] sm:$0xff]
    %v742 = vld [vmem:[%s697 + $0x160] sm:$0xff]
    %v743 = vld [vmem:[%s697 + $0x168] sm:$0xff]
    %v744 = vld [vmem:[%s697 + $0x170] sm:$0xff]
    %v745 = vld [vmem:[%s697 + $0x178] sm:$0xff]
    %v746 = vld [vmem:[%s697 + $0x180] sm:$0xff]
    %v747 = vld [vmem:[%s697 + $0x188] sm:$0xff]
    %v748 = vld [vmem:[%s697 + $0x190] sm:$0xff]
    %v749 = vld [vmem:[%s697 + $0x198] sm:$0xff]
    %v750 = vld [vmem:[%s697 + $0x1a0] sm:$0xff]
    %v751 = vld [vmem:[%s697 + $0x1a8] sm:$0xff]
    %v752 = vld [vmem:[%s697 + $0x1b0] sm:$0xff]
    %v753 = vld [vmem:[%s697 + $0x1b8] sm:$0xff]
    %v754 = vld [vmem:[%s697 + $0x1c0] sm:$0xff]
    %v755 = vld [vmem:[%s697 + $0x1c8] sm:$0xff]
    %v756 = vld [vmem:[%s697 + $0x1d0] sm:$0xff]
    %v757 = vld [vmem:[%s697 + $0x1d8] sm:$0xff]
    %v758 = vld [vmem:[%s697 + $0x1e0] sm:$0xff]
    %v759 = vld [vmem:[%s697 + $0x1e8] sm:$0xff]
    %v760 = vld [vmem:[%s697 + $0x1f0] sm:$0xff]
    %v761 = vld [vmem:[%s697 + $0x1f8] sm:$0xff]
    %v763 = vlaneseq
    %v764 = vshrl.u32 %v763, 7
    %v765 = vsub.s32 0, %v764
    %v766 = vrot.slane %v696, %v765
    %v767 = vlaneseq
    %v768 = vshrl.u32 %v767, 7
    %v769 = vsub.s32 1, %v768
    %v770 = vrot.slane %v696, %v769
    %773 = vmatprep.subr.mxu0 %v699
    %774 = vmatpush1.msra.mxu0 %v698
    %775 = vmatprep.subr.mxu0 %v701
    %776 = vmatpush1.msra.mxu0 %v700
    %777 = vmatprep.subr.mxu0 %v703
    %778 = vmatpush1.msra.mxu0 %v702
    %779 = vmatprep.subr.mxu0 %v705
    %780 = vmatpush1.msra.mxu0 %v704
    %781 = vmatprep.subr.mxu0 %v707
    %782 = vmatpush1.msra.mxu0 %v706
    %783 = vmatprep.subr.mxu0 %v709
    %784 = vmatpush1.msra.mxu0 %v708
    %785 = vmatprep.subr.mxu0 %v711
    %786 = vmatpush1.msra.mxu0 %v710
    %787 = vmatprep.subr.mxu0 %v713
    %788 = vmatpush1.msra.mxu0 %v712
    %789 = vmatprep.subr.mxu0 %v715
    %790 = vmatpush1.msra.mxu0 %v714
    %791 = vmatprep.subr.mxu0 %v717
    %792 = vmatpush1.msra.mxu0 %v716
    %793 = vmatprep.subr.mxu0 %v719
    %794 = vmatpush1.msra.mxu0 %v718
    %795 = vmatprep.subr.mxu0 %v721
    %796 = vmatpush1.msra.mxu0 %v720
    %797 = vmatprep.subr.mxu0 %v723
    %798 = vmatpush1.msra.mxu0 %v722
    %799 = vmatprep.subr.mxu0 %v725
    %800 = vmatpush1.msra.mxu0 %v724
    %801 = vmatprep.subr.mxu0 %v727
    %802 = vmatpush1.msra.mxu0 %v726
    %803 = vmatprep.subr.mxu0 %v729
    %804 = vmatpush1.msra.mxu0 %v728
    %805 = vmatprep.subr.mxu0 %v731
    %806 = vmatpush1.msra.mxu0 %v730
    %807 = vmatprep.subr.mxu0 %v733
    %808 = vmatpush1.msra.mxu0 %v732
    %809 = vmatprep.subr.mxu0 %v735
    %810 = vmatpush1.msra.mxu0 %v734
    %811 = vmatprep.subr.mxu0 %v737
    %812 = vmatpush1.msra.mxu0 %v736
    %813 = vmatprep.subr.mxu0 %v739
    %814 = vmatpush1.msra.mxu0 %v738
    %815 = vmatprep.subr.mxu0 %v741
    %816 = vmatpush1.msra.mxu0 %v740
    %817 = vmatprep.subr.mxu0 %v743
    %818 = vmatpush1.msra.mxu0 %v742
    %819 = vmatprep.subr.mxu0 %v745
    %820 = vmatpush1.msra.mxu0 %v744
    %821 = vmatprep.subr.mxu0 %v747
    %822 = vmatpush1.msra.mxu0 %v746
    %823 = vmatprep.subr.mxu0 %v749
    %824 = vmatpush1.msra.mxu0 %v748
    %825 = vmatprep.subr.mxu0 %v751
    %826 = vmatpush1.msra.mxu0 %v750
    %827 = vmatprep.subr.mxu0 %v753
    %828 = vmatpush1.msra.mxu0 %v752
    %829 = vmatprep.subr.mxu0 %v755
    %830 = vmatpush1.msra.mxu0 %v754
    %831 = vmatprep.subr.mxu0 %v757
    %832 = vmatpush1.msra.mxu0 %v756
    %833 = vmatprep.subr.mxu0 %v759
    %834 = vmatpush1.msra.mxu0 %v758
    %835 = vmatprep.subr.mxu0 %v761
    %836 = vmatpush1.msra.mxu0 %v760
    %837 = vmatprep.mubr.f32.mxu0 %v694
    %838 = vmatmul.mubr.f32.gmra.mrb[0].mxu0 %v693
    %v839 = vpop.f32.mrb[0].mxu0
    %v840 = vadd.f32 %v766, %v839
    %v841 = vpop.f32.mrb[0].mxu0
    %v842 = vadd.f32 %v770, %v841
    %843 = vdwg.mxu0
    %vm844 = vcmp.ge.f32.partialorder %v840, 0.0
    %vm845 = vcmp.ge.f32.partialorder %v842, 0.0
    %v846 = vsel %vm844, 1.4142135, 0.28284273
    %v847 = vsel %vm845, 1.4142135, 0.28284273
    %v848 = vmul.f32 %v840, %v846
    %v849 = vmul.f32 %v842, %v847
    %s850 = scalar_lea.vmem [#allocation4], 227
    %v851 = vld [vmem:[%s850] ss:$8 sm:$0x3]
    %s852 = scalar_lea.vmem [#allocation6], 1536
    %v853 = vld [vmem:[%s852] sm:$0xff]
    %v854 = vld [vmem:[%s852 + $0x8] sm:$0xff]
    %v855 = vld [vmem:[%s852 + $0x10] sm:$0xff]
    %v856 = vld [vmem:[%s852 + $0x18] sm:$0xff]
    %v857 = vld [vmem:[%s852 + $0x20] sm:$0xff]
    %v858 = vld [vmem:[%s852 + $0x28] sm:$0xff]
    %v859 = vld [vmem:[%s852 + $0x30] sm:$0xff]
    %v860 = vld [vmem:[%s852 + $0x38] sm:$0xff]
    %v861 = vld [vmem:[%s852 + $0x40] sm:$0xff]
    %v862 = vld [vmem:[%s852 + $0x48] sm:$0xff]
    %v863 = vld [vmem:[%s852 + $0x50] sm:$0xff]
    %v864 = vld [vmem:[%s852 + $0x58] sm:$0xff]
    %v865 = vld [vmem:[%s852 + $0x60] sm:$0xff]
    %v866 = vld [vmem:[%s852 + $0x68] sm:$0xff]
    %v867 = vld [vmem:[%s852 + $0x70] sm:$0xff]
    %v868 = vld [vmem:[%s852 + $0x78] sm:$0xff]
    %v869 = vld [vmem:[%s852 + $0x80] sm:$0xff]
    %v870 = vld [vmem:[%s852 + $0x88] sm:$0xff]
    %v871 = vld [vmem:[%s852 + $0x90] sm:$0xff]
    %v872 = vld [vmem:[%s852 + $0x98] sm:$0xff]
    %v873 = vld [vmem:[%s852 + $0xa0] sm:$0xff]
    %v874 = vld [vmem:[%s852 + $0xa8] sm:$0xff]
    %v875 = vld [vmem:[%s852 + $0xb0] sm:$0xff]
    %v876 = vld [vmem:[%s852 + $0xb8] sm:$0xff]
    %v877 = vld [vmem:[%s852 + $0xc0] sm:$0xff]
    %v878 = vld [vmem:[%s852 + $0xc8] sm:$0xff]
    %v879 = vld [vmem:[%s852 + $0xd0] sm:$0xff]
    %v880 = vld [vmem:[%s852 + $0xd8] sm:$0xff]
    %v881 = vld [vmem:[%s852 + $0xe0] sm:$0xff]
    %v882 = vld [vmem:[%s852 + $0xe8] sm:$0xff]
    %v883 = vld [vmem:[%s852 + $0xf0] sm:$0xff]
    %v884 = vld [vmem:[%s852 + $0xf8] sm:$0xff]
    %v885 = vld [vmem:[%s852 + $0x100] sm:$0xff]
    %v886 = vld [vmem:[%s852 + $0x108] sm:$0xff]
    %v887 = vld [vmem:[%s852 + $0x110] sm:$0xff]
    %v888 = vld [vmem:[%s852 + $0x118] sm:$0xff]
    %v889 = vld [vmem:[%s852 + $0x120] sm:$0xff]
    %v890 = vld [vmem:[%s852 + $0x128] sm:$0xff]
    %v891 = vld [vmem:[%s852 + $0x130] sm:$0xff]
    %v892 = vld [vmem:[%s852 + $0x138] sm:$0xff]
    %v893 = vld [vmem:[%s852 + $0x140] sm:$0xff]
    %v894 = vld [vmem:[%s852 + $0x148] sm:$0xff]
    %v895 = vld [vmem:[%s852 + $0x150] sm:$0xff]
    %v896 = vld [vmem:[%s852 + $0x158] sm:$0xff]
    %v897 = vld [vmem:[%s852 + $0x160] sm:$0xff]
    %v898 = vld [vmem:[%s852 + $0x168] sm:$0xff]
    %v899 = vld [vmem:[%s852 + $0x170] sm:$0xff]
    %v900 = vld [vmem:[%s852 + $0x178] sm:$0xff]
    %v901 = vld [vmem:[%s852 + $0x180] sm:$0xff]
    %v902 = vld [vmem:[%s852 + $0x188] sm:$0xff]
    %v903 = vld [vmem:[%s852 + $0x190] sm:$0xff]
    %v904 = vld [vmem:[%s852 + $0x198] sm:$0xff]
    %v905 = vld [vmem:[%s852 + $0x1a0] sm:$0xff]
    %v906 = vld [vmem:[%s852 + $0x1a8] sm:$0xff]
    %v907 = vld [vmem:[%s852 + $0x1b0] sm:$0xff]
    %v908 = vld [vmem:[%s852 + $0x1b8] sm:$0xff]
    %v909 = vld [vmem:[%s852 + $0x1c0] sm:$0xff]
    %v910 = vld [vmem:[%s852 + $0x1c8] sm:$0xff]
    %v911 = vld [vmem:[%s852 + $0x1d0] sm:$0xff]
    %v912 = vld [vmem:[%s852 + $0x1d8] sm:$0xff]
    %v913 = vld [vmem:[%s852 + $0x1e0] sm:$0xff]
    %v914 = vld [vmem:[%s852 + $0x1e8] sm:$0xff]
    %v915 = vld [vmem:[%s852 + $0x1f0] sm:$0xff]
    %v916 = vld [vmem:[%s852 + $0x1f8] sm:$0xff]
    %v918 = vlaneseq
    %v919 = vshrl.u32 %v918, 7
    %v920 = vsub.s32 0, %v919
    %v921 = vrot.slane %v851, %v920
    %v922 = vlaneseq
    %v923 = vshrl.u32 %v922, 7
    %v924 = vsub.s32 1, %v923
    %v925 = vrot.slane %v851, %v924
    %928 = vmatprep.subr.mxu0 %v854
    %929 = vmatpush1.msra.mxu0 %v853
    %930 = vmatprep.subr.mxu0 %v856
    %931 = vmatpush1.msra.mxu0 %v855
    %932 = vmatprep.subr.mxu0 %v858
    %933 = vmatpush1.msra.mxu0 %v857
    %934 = vmatprep.subr.mxu0 %v860
    %935 = vmatpush1.msra.mxu0 %v859
    %936 = vmatprep.subr.mxu0 %v862
    %937 = vmatpush1.msra.mxu0 %v861
    %938 = vmatprep.subr.mxu0 %v864
    %939 = vmatpush1.msra.mxu0 %v863
    %940 = vmatprep.subr.mxu0 %v866
    %941 = vmatpush1.msra.mxu0 %v865
    %942 = vmatprep.subr.mxu0 %v868
    %943 = vmatpush1.msra.mxu0 %v867
    %944 = vmatprep.subr.mxu0 %v870
    %945 = vmatpush1.msra.mxu0 %v869
    %946 = vmatprep.subr.mxu0 %v872
    %947 = vmatpush1.msra.mxu0 %v871
    %948 = vmatprep.subr.mxu0 %v874
    %949 = vmatpush1.msra.mxu0 %v873
    %950 = vmatprep.subr.mxu0 %v876
    %951 = vmatpush1.msra.mxu0 %v875
    %952 = vmatprep.subr.mxu0 %v878
    %953 = vmatpush1.msra.mxu0 %v877
    %954 = vmatprep.subr.mxu0 %v880
    %955 = vmatpush1.msra.mxu0 %v879
    %956 = vmatprep.subr.mxu0 %v882
    %957 = vmatpush1.msra.mxu0 %v881
    %958 = vmatprep.subr.mxu0 %v884
    %959 = vmatpush1.msra.mxu0 %v883
    %960 = vmatprep.subr.mxu0 %v886
    %961 = vmatpush1.msra.mxu0 %v885
    %962 = vmatprep.subr.mxu0 %v888
    %963 = vmatpush1.msra.mxu0 %v887
    %964 = vmatprep.subr.mxu0 %v890
    %965 = vmatpush1.msra.mxu0 %v889
    %966 = vmatprep.subr.mxu0 %v892
    %967 = vmatpush1.msra.mxu0 %v891
    %968 = vmatprep.subr.mxu0 %v894
    %969 = vmatpush1.msra.mxu0 %v893
    %970 = vmatprep.subr.mxu0 %v896
    %971 = vmatpush1.msra.mxu0 %v895
    %972 = vmatprep.subr.mxu0 %v898
    %973 = vmatpush1.msra.mxu0 %v897
    %974 = vmatprep.subr.mxu0 %v900
    %975 = vmatpush1.msra.mxu0 %v899
    %976 = vmatprep.subr.mxu0 %v902
    %977 = vmatpush1.msra.mxu0 %v901
    %978 = vmatprep.subr.mxu0 %v904
    %979 = vmatpush1.msra.mxu0 %v903
    %980 = vmatprep.subr.mxu0 %v906
    %981 = vmatpush1.msra.mxu0 %v905
    %982 = vmatprep.subr.mxu0 %v908
    %983 = vmatpush1.msra.mxu0 %v907
    %984 = vmatprep.subr.mxu0 %v910
    %985 = vmatpush1.msra.mxu0 %v909
    %986 = vmatprep.subr.mxu0 %v912
    %987 = vmatpush1.msra.mxu0 %v911
    %988 = vmatprep.subr.mxu0 %v914
    %989 = vmatpush1.msra.mxu0 %v913
    %990 = vmatprep.subr.mxu0 %v916
    %991 = vmatpush1.msra.mxu0 %v915
    %992 = vmatprep.mubr.f32.mxu0 %v849
    %993 = vmatmul.mubr.f32.gmra.mrb[0].mxu0 %v848
    %v994 = vpop.f32.mrb[0].mxu0
    %v995 = vadd.f32 %v921, %v994
    %v996 = vpop.f32.mrb[0].mxu0
    %v997 = vadd.f32 %v925, %v996
    %998 = vdwg.mxu0
    %vm999 = vcmp.ge.f32.partialorder %v995, 0.0
    %vm1000 = vcmp.ge.f32.partialorder %v997, 0.0
    %v1001 = vsel %vm999, 1.4142135, 0.28284273
    %v1002 = vsel %vm1000, 1.4142135, 0.28284273
    %v1003 = vmul.f32 %v995, %v1001
    %v1004 = vmul.f32 %v997, %v1002
    %s1005 = scalar_lea.vmem [#allocation4], 228
    %v1006 = vld [vmem:[%s1005] ss:$8 sm:$0x3]
    %s1007 = scalar_lea.vmem [#allocation6], 2048
    %v1008 = vld [vmem:[%s1007] sm:$0xff]
    %v1009 = vld [vmem:[%s1007 + $0x8] sm:$0xff]
    %v1010 = vld [vmem:[%s1007 + $0x10] sm:$0xff]
    %v1011 = vld [vmem:[%s1007 + $0x18] sm:$0xff]
    %v1012 = vld [vmem:[%s1007 + $0x20] sm:$0xff]
    %v1013 = vld [vmem:[%s1007 + $0x28] sm:$0xff]
    %v1014 = vld [vmem:[%s1007 + $0x30] sm:$0xff]
    %v1015 = vld [vmem:[%s1007 + $0x38] sm:$0xff]
    %v1016 = vld [vmem:[%s1007 + $0x40] sm:$0xff]
    %v1017 = vld [vmem:[%s1007 + $0x48] sm:$0xff]
    %v1018 = vld [vmem:[%s1007 + $0x50] sm:$0xff]
    %v1019 = vld [vmem:[%s1007 + $0x58] sm:$0xff]
    %v1020 = vld [vmem:[%s1007 + $0x60] sm:$0xff]
    %v1021 = vld [vmem:[%s1007 + $0x68] sm:$0xff]
    %v1022 = vld [vmem:[%s1007 + $0x70] sm:$0xff]
    %v1023 = vld [vmem:[%s1007 + $0x78] sm:$0xff]
    %v1024 = vld [vmem:[%s1007 + $0x80] sm:$0xff]
    %v1025 = vld [vmem:[%s1007 + $0x88] sm:$0xff]
    %v1026 = vld [vmem:[%s1007 + $0x90] sm:$0xff]
    %v1027 = vld [vmem:[%s1007 + $0x98] sm:$0xff]
    %v1028 = vld [vmem:[%s1007 + $0xa0] sm:$0xff]
    %v1029 = vld [vmem:[%s1007 + $0xa8] sm:$0xff]
    %v1030 = vld [vmem:[%s1007 + $0xb0] sm:$0xff]
    %v1031 = vld [vmem:[%s1007 + $0xb8] sm:$0xff]
    %v1032 = vld [vmem:[%s1007 + $0xc0] sm:$0xff]
    %v1033 = vld [vmem:[%s1007 + $0xc8] sm:$0xff]
    %v1034 = vld [vmem:[%s1007 + $0xd0] sm:$0xff]
    %v1035 = vld [vmem:[%s1007 + $0xd8] sm:$0xff]
    %v1036 = vld [vmem:[%s1007 + $0xe0] sm:$0xff]
    %v1037 = vld [vmem:[%s1007 + $0xe8] sm:$0xff]
    %v1038 = vld [vmem:[%s1007 + $0xf0] sm:$0xff]
    %v1039 = vld [vmem:[%s1007 + $0xf8] sm:$0xff]
    %v1040 = vld [vmem:[%s1007 + $0x100] sm:$0xff]
    %v1041 = vld [vmem:[%s1007 + $0x108] sm:$0xff]
    %v1042 = vld [vmem:[%s1007 + $0x110] sm:$0xff]
    %v1043 = vld [vmem:[%s1007 + $0x118] sm:$0xff]
    %v1044 = vld [vmem:[%s1007 + $0x120] sm:$0xff]
    %v1045 = vld [vmem:[%s1007 + $0x128] sm:$0xff]
    %v1046 = vld [vmem:[%s1007 + $0x130] sm:$0xff]
    %v1047 = vld [vmem:[%s1007 + $0x138] sm:$0xff]
    %v1048 = vld [vmem:[%s1007 + $0x140] sm:$0xff]
    %v1049 = vld [vmem:[%s1007 + $0x148] sm:$0xff]
    %v1050 = vld [vmem:[%s1007 + $0x150] sm:$0xff]
    %v1051 = vld [vmem:[%s1007 + $0x158] sm:$0xff]
    %v1052 = vld [vmem:[%s1007 + $0x160] sm:$0xff]
    %v1053 = vld [vmem:[%s1007 + $0x168] sm:$0xff]
    %v1054 = vld [vmem:[%s1007 + $0x170] sm:$0xff]
    %v1055 = vld [vmem:[%s1007 + $0x178] sm:$0xff]
    %v1056 = vld [vmem:[%s1007 + $0x180] sm:$0xff]
    %v1057 = vld [vmem:[%s1007 + $0x188] sm:$0xff]
    %v1058 = vld [vmem:[%s1007 + $0x190] sm:$0xff]
    %v1059 = vld [vmem:[%s1007 + $0x198] sm:$0xff]
    %v1060 = vld [vmem:[%s1007 + $0x1a0] sm:$0xff]
    %v1061 = vld [vmem:[%s1007 + $0x1a8] sm:$0xff]
    %v1062 = vld [vmem:[%s1007 + $0x1b0] sm:$0xff]
    %v1063 = vld [vmem:[%s1007 + $0x1b8] sm:$0xff]
    %v1064 = vld [vmem:[%s1007 + $0x1c0] sm:$0xff]
    %v1065 = vld [vmem:[%s1007 + $0x1c8] sm:$0xff]
    %v1066 = vld [vmem:[%s1007 + $0x1d0] sm:$0xff]
    %v1067 = vld [vmem:[%s1007 + $0x1d8] sm:$0xff]
    %v1068 = vld [vmem:[%s1007 + $0x1e0] sm:$0xff]
    %v1069 = vld [vmem:[%s1007 + $0x1e8] sm:$0xff]
    %v1070 = vld [vmem:[%s1007 + $0x1f0] sm:$0xff]
    %v1071 = vld [vmem:[%s1007 + $0x1f8] sm:$0xff]
    %v1073 = vlaneseq
    %v1074 = vshrl.u32 %v1073, 7
    %v1075 = vsub.s32 0, %v1074
    %v1076 = vrot.slane %v1006, %v1075
    %v1077 = vlaneseq
    %v1078 = vshrl.u32 %v1077, 7
    %v1079 = vsub.s32 1, %v1078
    %v1080 = vrot.slane %v1006, %v1079
    %1083 = vmatprep.subr.mxu0 %v1009
    %1084 = vmatpush1.msra.mxu0 %v1008
    %1085 = vmatprep.subr.mxu0 %v1011
    %1086 = vmatpush1.msra.mxu0 %v1010
    %1087 = vmatprep.subr.mxu0 %v1013
    %1088 = vmatpush1.msra.mxu0 %v1012
    %1089 = vmatprep.subr.mxu0 %v1015
    %1090 = vmatpush1.msra.mxu0 %v1014
    %1091 = vmatprep.subr.mxu0 %v1017
    %1092 = vmatpush1.msra.mxu0 %v1016
    %1093 = vmatprep.subr.mxu0 %v1019
    %1094 = vmatpush1.msra.mxu0 %v1018
    %1095 = vmatprep.subr.mxu0 %v1021
    %1096 = vmatpush1.msra.mxu0 %v1020
    %1097 = vmatprep.subr.mxu0 %v1023
    %1098 = vmatpush1.msra.mxu0 %v1022
    %1099 = vmatprep.subr.mxu0 %v1025
    %1100 = vmatpush1.msra.mxu0 %v1024
    %1101 = vmatprep.subr.mxu0 %v1027
    %1102 = vmatpush1.msra.mxu0 %v1026
    %1103 = vmatprep.subr.mxu0 %v1029
    %1104 = vmatpush1.msra.mxu0 %v1028
    %1105 = vmatprep.subr.mxu0 %v1031
    %1106 = vmatpush1.msra.mxu0 %v1030
    %1107 = vmatprep.subr.mxu0 %v1033
    %1108 = vmatpush1.msra.mxu0 %v1032
    %1109 = vmatprep.subr.mxu0 %v1035
    %1110 = vmatpush1.msra.mxu0 %v1034
    %1111 = vmatprep.subr.mxu0 %v1037
    %1112 = vmatpush1.msra.mxu0 %v1036
    %1113 = vmatprep.subr.mxu0 %v1039
    %1114 = vmatpush1.msra.mxu0 %v1038
    %1115 = vmatprep.subr.mxu0 %v1041
    %1116 = vmatpush1.msra.mxu0 %v1040
    %1117 = vmatprep.subr.mxu0 %v1043
    %1118 = vmatpush1.msra.mxu0 %v1042
    %1119 = vmatprep.subr.mxu0 %v1045
    %1120 = vmatpush1.msra.mxu0 %v1044
    %1121 = vmatprep.subr.mxu0 %v1047
    %1122 = vmatpush1.msra.mxu0 %v1046
    %1123 = vmatprep.subr.mxu0 %v1049
    %1124 = vmatpush1.msra.mxu0 %v1048
    %1125 = vmatprep.subr.mxu0 %v1051
    %1126 = vmatpush1.msra.mxu0 %v1050
    %1127 = vmatprep.subr.mxu0 %v1053
    %1128 = vmatpush1.msra.mxu0 %v1052
    %1129 = vmatprep.subr.mxu0 %v1055
    %1130 = vmatpush1.msra.mxu0 %v1054
    %1131 = vmatprep.subr.mxu0 %v1057
    %1132 = vmatpush1.msra.mxu0 %v1056
    %1133 = vmatprep.subr.mxu0 %v1059
    %1134 = vmatpush1.msra.mxu0 %v1058
    %1135 = vmatprep.subr.mxu0 %v1061
    %1136 = vmatpush1.msra.mxu0 %v1060
    %1137 = vmatprep.subr.mxu0 %v1063
    %1138 = vmatpush1.msra.mxu0 %v1062
    %1139 = vmatprep.subr.mxu0 %v1065
    %1140 = vmatpush1.msra.mxu0 %v1064
    %1141 = vmatprep.subr.mxu0 %v1067
    %1142 = vmatpush1.msra.mxu0 %v1066
    %1143 = vmatprep.subr.mxu0 %v1069
    %1144 = vmatpush1.msra.mxu0 %v1068
    %1145 = vmatprep.subr.mxu0 %v1071
    %1146 = vmatpush1.msra.mxu0 %v1070
    %1147 = vmatprep.mubr.f32.mxu0 %v1004
    %1148 = vmatmul.mubr.f32.gmra.mrb[0].mxu0 %v1003
    %v1149 = vpop.f32.mrb[0].mxu0
    %v1150 = vadd.f32 %v1076, %v1149
    %v1151 = vpop.f32.mrb[0].mxu0
    %v1152 = vadd.f32 %v1080, %v1151
    %1153 = vdwg.mxu0
    %vm1154 = vcmp.ge.f32.partialorder %v1150, 0.0
    %vm1155 = vcmp.ge.f32.partialorder %v1152, 0.0
    %v1156 = vsel %vm1154, 1.4142135, 0.28284273
    %v1157 = vsel %vm1155, 1.4142135, 0.28284273
    %v1158 = vmul.f32 %v1150, %v1156
    %v1159 = vmul.f32 %v1152, %v1157
    %s1160 = scalar_lea.vmem [#allocation4], 229
    %v1161 = vld [vmem:[%s1160] ss:$8 sm:$0x3]
    %s1162 = scalar_lea.vmem [#allocation6], 2560
    %v1163 = vld [vmem:[%s1162] sm:$0xff]
    %v1164 = vld [vmem:[%s1162 + $0x8] sm:$0xff]
    %v1165 = vld [vmem:[%s1162 + $0x10] sm:$0xff]
    %v1166 = vld [vmem:[%s1162 + $0x18] sm:$0xff]
    %v1167 = vld [vmem:[%s1162 + $0x20] sm:$0xff]
    %v1168 = vld [vmem:[%s1162 + $0x28] sm:$0xff]
    %v1169 = vld [vmem:[%s1162 + $0x30] sm:$0xff]
    %v1170 = vld [vmem:[%s1162 + $0x38] sm:$0xff]
    %v1171 = vld [vmem:[%s1162 + $0x40] sm:$0xff]
    %v1172 = vld [vmem:[%s1162 + $0x48] sm:$0xff]
    %v1173 = vld [vmem:[%s1162 + $0x50] sm:$0xff]
    %v1174 = vld [vmem:[%s1162 + $0x58] sm:$0xff]
    %v1175 = vld [vmem:[%s1162 + $0x60] sm:$0xff]
    %v1176 = vld [vmem:[%s1162 + $0x68] sm:$0xff]
    %v1177 = vld [vmem:[%s1162 + $0x70] sm:$0xff]
    %v1178 = vld [vmem:[%s1162 + $0x78] sm:$0xff]
    %v1179 = vld [vmem:[%s1162 + $0x80] sm:$0xff]
    %v1180 = vld [vmem:[%s1162 + $0x88] sm:$0xff]
    %v1181 = vld [vmem:[%s1162 + $0x90] sm:$0xff]
    %v1182 = vld [vmem:[%s1162 + $0x98] sm:$0xff]
    %v1183 = vld [vmem:[%s1162 + $0xa0] sm:$0xff]
    %v1184 = vld [vmem:[%s1162 + $0xa8] sm:$0xff]
    %v1185 = vld [vmem:[%s1162 + $0xb0] sm:$0xff]
    %v1186 = vld [vmem:[%s1162 + $0xb8] sm:$0xff]
    %v1187 = vld [vmem:[%s1162 + $0xc0] sm:$0xff]
    %v1188 = vld [vmem:[%s1162 + $0xc8] sm:$0xff]
    %v1189 = vld [vmem:[%s1162 + $0xd0] sm:$0xff]
    %v1190 = vld [vmem:[%s1162 + $0xd8] sm:$0xff]
    %v1191 = vld [vmem:[%s1162 + $0xe0] sm:$0xff]
    %v1192 = vld [vmem:[%s1162 + $0xe8] sm:$0xff]
    %v1193 = vld [vmem:[%s1162 + $0xf0] sm:$0xff]
    %v1194 = vld [vmem:[%s1162 + $0xf8] sm:$0xff]
    %v1195 = vld [vmem:[%s1162 + $0x100] sm:$0xff]
    %v1196 = vld [vmem:[%s1162 + $0x108] sm:$0xff]
    %v1197 = vld [vmem:[%s1162 + $0x110] sm:$0xff]
    %v1198 = vld [vmem:[%s1162 + $0x118] sm:$0xff]
    %v1199 = vld [vmem:[%s1162 + $0x120] sm:$0xff]
    %v1200 = vld [vmem:[%s1162 + $0x128] sm:$0xff]
    %v1201 = vld [vmem:[%s1162 + $0x130] sm:$0xff]
    %v1202 = vld [vmem:[%s1162 + $0x138] sm:$0xff]
    %v1203 = vld [vmem:[%s1162 + $0x140] sm:$0xff]
    %v1204 = vld [vmem:[%s1162 + $0x148] sm:$0xff]
    %v1205 = vld [vmem:[%s1162 + $0x150] sm:$0xff]
    %v1206 = vld [vmem:[%s1162 + $0x158] sm:$0xff]
    %v1207 = vld [vmem:[%s1162 + $0x160] sm:$0xff]
    %v1208 = vld [vmem:[%s1162 + $0x168] sm:$0xff]
    %v1209 = vld [vmem:[%s1162 + $0x170] sm:$0xff]
    %v1210 = vld [vmem:[%s1162 + $0x178] sm:$0xff]
    %v1211 = vld [vmem:[%s1162 + $0x180] sm:$0xff]
    %v1212 = vld [vmem:[%s1162 + $0x188] sm:$0xff]
    %v1213 = vld [vmem:[%s1162 + $0x190] sm:$0xff]
    %v1214 = vld [vmem:[%s1162 + $0x198] sm:$0xff]
    %v1215 = vld [vmem:[%s1162 + $0x1a0] sm:$0xff]
    %v1216 = vld [vmem:[%s1162 + $0x1a8] sm:$0xff]
    %v1217 = vld [vmem:[%s1162 + $0x1b0] sm:$0xff]
    %v1218 = vld [vmem:[%s1162 + $0x1b8] sm:$0xff]
    %v1219 = vld [vmem:[%s1162 + $0x1c0] sm:$0xff]
    %v1220 = vld [vmem:[%s1162 + $0x1c8] sm:$0xff]
    %v1221 = vld [vmem:[%s1162 + $0x1d0] sm:$0xff]
    %v1222 = vld [vmem:[%s1162 + $0x1d8] sm:$0xff]
    %v1223 = vld [vmem:[%s1162 + $0x1e0] sm:$0xff]
    %v1224 = vld [vmem:[%s1162 + $0x1e8] sm:$0xff]
    %v1225 = vld [vmem:[%s1162 + $0x1f0] sm:$0xff]
    %v1226 = vld [vmem:[%s1162 + $0x1f8] sm:$0xff]
    %v1228 = vlaneseq
    %v1229 = vshrl.u32 %v1228, 7
    %v1230 = vsub.s32 0, %v1229
    %v1231 = vrot.slane %v1161, %v1230
    %v1232 = vlaneseq
    %v1233 = vshrl.u32 %v1232, 7
    %v1234 = vsub.s32 1, %v1233
    %v1235 = vrot.slane %v1161, %v1234
    %1238 = vmatprep.subr.mxu0 %v1164
    %1239 = vmatpush1.msra.mxu0 %v1163
    %1240 = vmatprep.subr.mxu0 %v1166
    %1241 = vmatpush1.msra.mxu0 %v1165
    %1242 = vmatprep.subr.mxu0 %v1168
    %1243 = vmatpush1.msra.mxu0 %v1167
    %1244 = vmatprep.subr.mxu0 %v1170
    %1245 = vmatpush1.msra.mxu0 %v1169
    %1246 = vmatprep.subr.mxu0 %v1172
    %1247 = vmatpush1.msra.mxu0 %v1171
    %1248 = vmatprep.subr.mxu0 %v1174
    %1249 = vmatpush1.msra.mxu0 %v1173
    %1250 = vmatprep.subr.mxu0 %v1176
    %1251 = vmatpush1.msra.mxu0 %v1175
    %1252 = vmatprep.subr.mxu0 %v1178
    %1253 = vmatpush1.msra.mxu0 %v1177
    %1254 = vmatprep.subr.mxu0 %v1180
    %1255 = vmatpush1.msra.mxu0 %v1179
    %1256 = vmatprep.subr.mxu0 %v1182
    %1257 = vmatpush1.msra.mxu0 %v1181
    %1258 = vmatprep.subr.mxu0 %v1184
    %1259 = vmatpush1.msra.mxu0 %v1183
    %1260 = vmatprep.subr.mxu0 %v1186
    %1261 = vmatpush1.msra.mxu0 %v1185
    %1262 = vmatprep.subr.mxu0 %v1188
    %1263 = vmatpush1.msra.mxu0 %v1187
    %1264 = vmatprep.subr.mxu0 %v1190
    %1265 = vmatpush1.msra.mxu0 %v1189
    %1266 = vmatprep.subr.mxu0 %v1192
    %1267 = vmatpush1.msra.mxu0 %v1191
    %1268 = vmatprep.subr.mxu0 %v1194
    %1269 = vmatpush1.msra.mxu0 %v1193
    %1270 = vmatprep.subr.mxu0 %v1196
    %1271 = vmatpush1.msra.mxu0 %v1195
    %1272 = vmatprep.subr.mxu0 %v1198
    %1273 = vmatpush1.msra.mxu0 %v1197
    %1274 = vmatprep.subr.mxu0 %v1200
    %1275 = vmatpush1.msra.mxu0 %v1199
    %1276 = vmatprep.subr.mxu0 %v1202
    %1277 = vmatpush1.msra.mxu0 %v1201
    %1278 = vmatprep.subr.mxu0 %v1204
    %1279 = vmatpush1.msra.mxu0 %v1203
    %1280 = vmatprep.subr.mxu0 %v1206
    %1281 = vmatpush1.msra.mxu0 %v1205
    %1282 = vmatprep.subr.mxu0 %v1208
    %1283 = vmatpush1.msra.mxu0 %v1207
    %1284 = vmatprep.subr.mxu0 %v1210
    %1285 = vmatpush1.msra.mxu0 %v1209
    %1286 = vmatprep.subr.mxu0 %v1212
    %1287 = vmatpush1.msra.mxu0 %v1211
    %1288 = vmatprep.subr.mxu0 %v1214
    %1289 = vmatpush1.msra.mxu0 %v1213
    %1290 = vmatprep.subr.mxu0 %v1216
    %1291 = vmatpush1.msra.mxu0 %v1215
    %1292 = vmatprep.subr.mxu0 %v1218
    %1293 = vmatpush1.msra.mxu0 %v1217
    %1294 = vmatprep.subr.mxu0 %v1220
    %1295 = vmatpush1.msra.mxu0 %v1219
    %1296 = vmatprep.subr.mxu0 %v1222
    %1297 = vmatpush1.msra.mxu0 %v1221
    %1298 = vmatprep.subr.mxu0 %v1224
    %1299 = vmatpush1.msra.mxu0 %v1223
    %1300 = vmatprep.subr.mxu0 %v1226
    %1301 = vmatpush1.msra.mxu0 %v1225
    %1302 = vmatprep.mubr.f32.mxu0 %v1159
    %1303 = vmatmul.mubr.f32.gmra.mrb[0].mxu0 %v1158
    %v1304 = vpop.f32.mrb[0].mxu0
    %v1305 = vadd.f32 %v1231, %v1304
    %v1306 = vpop.f32.mrb[0].mxu0
    %v1307 = vadd.f32 %v1235, %v1306
    %1308 = vdwg.mxu0
    %vm1309 = vcmp.ge.f32.partialorder %v1305, 0.0
    %vm1310 = vcmp.ge.f32.partialorder %v1307, 0.0
    %v1311 = vsel %vm1309, 1.4142135, 0.28284273
    %v1312 = vsel %vm1310, 1.4142135, 0.28284273
    %v1313 = vmul.f32 %v1305, %v1311
    %v1314 = vmul.f32 %v1307, %v1312
    %s1315 = scalar_lea.vmem [#allocation4], 230
    %v1316 = vld [vmem:[%s1315] ss:$8 sm:$0x3]
    %s1317 = scalar_lea.vmem [#allocation6], 3072
    %v1318 = vld [vmem:[%s1317] sm:$0xff]
    %v1319 = vld [vmem:[%s1317 + $0x8] sm:$0xff]
    %v1320 = vld [vmem:[%s1317 + $0x10] sm:$0xff]
    %v1321 = vld [vmem:[%s1317 + $0x18] sm:$0xff]
    %v1322 = vld [vmem:[%s1317 + $0x20] sm:$0xff]
    %v1323 = vld [vmem:[%s1317 + $0x28] sm:$0xff]
    %v1324 = vld [vmem:[%s1317 + $0x30] sm:$0xff]
    %v1325 = vld [vmem:[%s1317 + $0x38] sm:$0xff]
    %v1326 = vld [vmem:[%s1317 + $0x40] sm:$0xff]
    %v1327 = vld [vmem:[%s1317 + $0x48] sm:$0xff]
    %v1328 = vld [vmem:[%s1317 + $0x50] sm:$0xff]
    %v1329 = vld [vmem:[%s1317 + $0x58] sm:$0xff]
    %v1330 = vld [vmem:[%s1317 + $0x60] sm:$0xff]
    %v1331 = vld [vmem:[%s1317 + $0x68] sm:$0xff]
    %v1332 = vld [vmem:[%s1317 + $0x70] sm:$0xff]
    %v1333 = vld [vmem:[%s1317 + $0x78] sm:$0xff]
    %v1334 = vld [vmem:[%s1317 + $0x80] sm:$0xff]
    %v1335 = vld [vmem:[%s1317 + $0x88] sm:$0xff]
    %v1336 = vld [vmem:[%s1317 + $0x90] sm:$0xff]
    %v1337 = vld [vmem:[%s1317 + $0x98] sm:$0xff]
    %v1338 = vld [vmem:[%s1317 + $0xa0] sm:$0xff]
    %v1339 = vld [vmem:[%s1317 + $0xa8] sm:$0xff]
    %v1340 = vld [vmem:[%s1317 + $0xb0] sm:$0xff]
    %v1341 = vld [vmem:[%s1317 + $0xb8] sm:$0xff]
    %v1342 = vld [vmem:[%s1317 + $0xc0] sm:$0xff]
    %v1343 = vld [vmem:[%s1317 + $0xc8] sm:$0xff]
    %v1344 = vld [vmem:[%s1317 + $0xd0] sm:$0xff]
    %v1345 = vld [vmem:[%s1317 + $0xd8] sm:$0xff]
    %v1346 = vld [vmem:[%s1317 + $0xe0] sm:$0xff]
    %v1347 = vld [vmem:[%s1317 + $0xe8] sm:$0xff]
    %v1348 = vld [vmem:[%s1317 + $0xf0] sm:$0xff]
    %v1349 = vld [vmem:[%s1317 + $0xf8] sm:$0xff]
    %v1350 = vld [vmem:[%s1317 + $0x100] sm:$0xff]
    %v1351 = vld [vmem:[%s1317 + $0x108] sm:$0xff]
    %v1352 = vld [vmem:[%s1317 + $0x110] sm:$0xff]
    %v1353 = vld [vmem:[%s1317 + $0x118] sm:$0xff]
    %v1354 = vld [vmem:[%s1317 + $0x120] sm:$0xff]
    %v1355 = vld [vmem:[%s1317 + $0x128] sm:$0xff]
    %v1356 = vld [vmem:[%s1317 + $0x130] sm:$0xff]
    %v1357 = vld [vmem:[%s1317 + $0x138] sm:$0xff]
    %v1358 = vld [vmem:[%s1317 + $0x140] sm:$0xff]
    %v1359 = vld [vmem:[%s1317 + $0x148] sm:$0xff]
    %v1360 = vld [vmem:[%s1317 + $0x150] sm:$0xff]
    %v1361 = vld [vmem:[%s1317 + $0x158] sm:$0xff]
    %v1362 = vld [vmem:[%s1317 + $0x160] sm:$0xff]
    %v1363 = vld [vmem:[%s1317 + $0x168] sm:$0xff]
    %v1364 = vld [vmem:[%s1317 + $0x170] sm:$0xff]
    %v1365 = vld [vmem:[%s1317 + $0x178] sm:$0xff]
    %v1366 = vld [vmem:[%s1317 + $0x180] sm:$0xff]
    %v1367 = vld [vmem:[%s1317 + $0x188] sm:$0xff]
    %v1368 = vld [vmem:[%s1317 + $0x190] sm:$0xff]
    %v1369 = vld [vmem:[%s1317 + $0x198] sm:$0xff]
    %v1370 = vld [vmem:[%s1317 + $0x1a0] sm:$0xff]
    %v1371 = vld [vmem:[%s1317 + $0x1a8] sm:$0xff]
    %v1372 = vld [vmem:[%s1317 + $0x1b0] sm:$0xff]
    %v1373 = vld [vmem:[%s1317 + $0x1b8] sm:$0xff]
    %v1374 = vld [vmem:[%s1317 + $0x1c0] sm:$0xff]
    %v1375 = vld [vmem:[%s1317 + $0x1c8] sm:$0xff]
    %v1376 = vld [vmem:[%s1317 + $0x1d0] sm:$0xff]
    %v1377 = vld [vmem:[%s1317 + $0x1d8] sm:$0xff]
    %v1378 = vld [vmem:[%s1317 + $0x1e0] sm:$0xff]
    %v1379 = vld [vmem:[%s1317 + $0x1e8] sm:$0xff]
    %v1380 = vld [vmem:[%s1317 + $0x1f0] sm:$0xff]
    %v1381 = vld [vmem:[%s1317 + $0x1f8] sm:$0xff]
    %v1383 = vlaneseq
    %v1384 = vshrl.u32 %v1383, 7
    %v1385 = vsub.s32 0, %v1384
    %v1386 = vrot.slane %v1316, %v1385
    %v1387 = vlaneseq
    %v1388 = vshrl.u32 %v1387, 7
    %v1389 = vsub.s32 1, %v1388
    %v1390 = vrot.slane %v1316, %v1389
    %1393 = vmatprep.subr.mxu0 %v1319
    %1394 = vmatpush1.msra.mxu0 %v1318
    %1395 = vmatprep.subr.mxu0 %v1321
    %1396 = vmatpush1.msra.mxu0 %v1320
    %1397 = vmatprep.subr.mxu0 %v1323
    %1398 = vmatpush1.msra.mxu0 %v1322
    %1399 = vmatprep.subr.mxu0 %v1325
    %1400 = vmatpush1.msra.mxu0 %v1324
    %1401 = vmatprep.subr.mxu0 %v1327
    %1402 = vmatpush1.msra.mxu0 %v1326
    %1403 = vmatprep.subr.mxu0 %v1329
    %1404 = vmatpush1.msra.mxu0 %v1328
    %1405 = vmatprep.subr.mxu0 %v1331
    %1406 = vmatpush1.msra.mxu0 %v1330
    %1407 = vmatprep.subr.mxu0 %v1333
    %1408 = vmatpush1.msra.mxu0 %v1332
    %1409 = vmatprep.subr.mxu0 %v1335
    %1410 = vmatpush1.msra.mxu0 %v1334
    %1411 = vmatprep.subr.mxu0 %v1337
    %1412 = vmatpush1.msra.mxu0 %v1336
    %1413 = vmatprep.subr.mxu0 %v1339
    %1414 = vmatpush1.msra.mxu0 %v1338
    %1415 = vmatprep.subr.mxu0 %v1341
    %1416 = vmatpush1.msra.mxu0 %v1340
    %1417 = vmatprep.subr.mxu0 %v1343
    %1418 = vmatpush1.msra.mxu0 %v1342
    %1419 = vmatprep.subr.mxu0 %v1345
    %1420 = vmatpush1.msra.mxu0 %v1344
    %1421 = vmatprep.subr.mxu0 %v1347
    %1422 = vmatpush1.msra.mxu0 %v1346
    %1423 = vmatprep.subr.mxu0 %v1349
    %1424 = vmatpush1.msra.mxu0 %v1348
    %1425 = vmatprep.subr.mxu0 %v1351
    %1426 = vmatpush1.msra.mxu0 %v1350
    %1427 = vmatprep.subr.mxu0 %v1353
    %1428 = vmatpush1.msra.mxu0 %v1352
    %1429 = vmatprep.subr.mxu0 %v1355
    %1430 = vmatpush1.msra.mxu0 %v1354
    %1431 = vmatprep.subr.mxu0 %v1357
    %1432 = vmatpush1.msra.mxu0 %v1356
    %1433 = vmatprep.subr.mxu0 %v1359
    %1434 = vmatpush1.msra.mxu0 %v1358
    %1435 = vmatprep.subr.mxu0 %v1361
    %1436 = vmatpush1.msra.mxu0 %v1360
    %1437 = vmatprep.subr.mxu0 %v1363
    %1438 = vmatpush1.msra.mxu0 %v1362
    %1439 = vmatprep.subr.mxu0 %v1365
    %1440 = vmatpush1.msra.mxu0 %v1364
    %1441 = vmatprep.subr.mxu0 %v1367
    %1442 = vmatpush1.msra.mxu0 %v1366
    %1443 = vmatprep.subr.mxu0 %v1369
    %1444 = vmatpush1.msra.mxu0 %v1368
    %1445 = vmatprep.subr.mxu0 %v1371
    %1446 = vmatpush1.msra.mxu0 %v1370
    %1447 = vmatprep.subr.mxu0 %v1373
    %1448 = vmatpush1.msra.mxu0 %v1372
    %1449 = vmatprep.subr.mxu0 %v1375
    %1450 = vmatpush1.msra.mxu0 %v1374
    %1451 = vmatprep.subr.mxu0 %v1377
    %1452 = vmatpush1.msra.mxu0 %v1376
    %1453 = vmatprep.subr.mxu0 %v1379
    %1454 = vmatpush1.msra.mxu0 %v1378
    %1455 = vmatprep.subr.mxu0 %v1381
    %1456 = vmatpush1.msra.mxu0 %v1380
    %1457 = vmatprep.mubr.f32.mxu0 %v1314
    %1458 = vmatmul.mubr.f32.gmra.mrb[0].mxu0 %v1313
    %v1459 = vpop.f32.mrb[0].mxu0
    %v1460 = vadd.f32 %v1386, %v1459
    %v1461 = vpop.f32.mrb[0].mxu0
    %v1462 = vadd.f32 %v1390, %v1461
    %1463 = vdwg.mxu0
    %vm1464 = vcmp.ge.f32.partialorder %v1460, 0.0
    %vm1465 = vcmp.ge.f32.partialorder %v1462, 0.0
    %v1466 = vsel %vm1464, 1.4142135, 0.28284273
    %v1467 = vsel %vm1465, 1.4142135, 0.28284273
    %v1468 = vmul.f32 %v1460, %v1466
    %v1469 = vmul.f32 %v1462, %v1467
    %s1470 = scalar_lea.vmem [#allocation4], 231
    %v1471 = vld [vmem:[%s1470] ss:$8 sm:$0x3]
    %s1472 = scalar_lea.vmem [#allocation6], 3584
    %v1473 = vld [vmem:[%s1472] sm:$0xff]
    %v1474 = vld [vmem:[%s1472 + $0x8] sm:$0xff]
    %v1475 = vld [vmem:[%s1472 + $0x10] sm:$0xff]
    %v1476 = vld [vmem:[%s1472 + $0x18] sm:$0xff]
    %v1477 = vld [vmem:[%s1472 + $0x20] sm:$0xff]
    %v1478 = vld [vmem:[%s1472 + $0x28] sm:$0xff]
    %v1479 = vld [vmem:[%s1472 + $0x30] sm:$0xff]
    %v1480 = vld [vmem:[%s1472 + $0x38] sm:$0xff]
    %v1481 = vld [vmem:[%s1472 + $0x40] sm:$0xff]
    %v1482 = vld [vmem:[%s1472 + $0x48] sm:$0xff]
    %v1483 = vld [vmem:[%s1472 + $0x50] sm:$0xff]
    %v1484 = vld [vmem:[%s1472 + $0x58] sm:$0xff]
    %v1485 = vld [vmem:[%s1472 + $0x60] sm:$0xff]
    %v1486 = vld [vmem:[%s1472 + $0x68] sm:$0xff]
    %v1487 = vld [vmem:[%s1472 + $0x70] sm:$0xff]
    %v1488 = vld [vmem:[%s1472 + $0x78] sm:$0xff]
    %v1489 = vld [vmem:[%s1472 + $0x80] sm:$0xff]
    %v1490 = vld [vmem:[%s1472 + $0x88] sm:$0xff]
    %v1491 = vld [vmem:[%s1472 + $0x90] sm:$0xff]
    %v1492 = vld [vmem:[%s1472 + $0x98] sm:$0xff]
    %v1493 = vld [vmem:[%s1472 + $0xa0] sm:$0xff]
    %v1494 = vld [vmem:[%s1472 + $0xa8] sm:$0xff]
    %v1495 = vld [vmem:[%s1472 + $0xb0] sm:$0xff]
    %v1496 = vld [vmem:[%s1472 + $0xb8] sm:$0xff]
    %v1497 = vld [vmem:[%s1472 + $0xc0] sm:$0xff]
    %v1498 = vld [vmem:[%s1472 + $0xc8] sm:$0xff]
    %v1499 = vld [vmem:[%s1472 + $0xd0] sm:$0xff]
    %v1500 = vld [vmem:[%s1472 + $0xd8] sm:$0xff]
    %v1501 = vld [vmem:[%s1472 + $0xe0] sm:$0xff]
    %v1502 = vld [vmem:[%s1472 + $0xe8] sm:$0xff]
    %v1503 = vld [vmem:[%s1472 + $0xf0] sm:$0xff]
    %v1504 = vld [vmem:[%s1472 + $0xf8] sm:$0xff]
    %v1505 = vld [vmem:[%s1472 + $0x100] sm:$0xff]
    %v1506 = vld [vmem:[%s1472 + $0x108] sm:$0xff]
    %v1507 = vld [vmem:[%s1472 + $0x110] sm:$0xff]
    %v1508 = vld [vmem:[%s1472 + $0x118] sm:$0xff]
    %v1509 = vld [vmem:[%s1472 + $0x120] sm:$0xff]
    %v1510 = vld [vmem:[%s1472 + $0x128] sm:$0xff]
    %v1511 = vld [vmem:[%s1472 + $0x130] sm:$0xff]
    %v1512 = vld [vmem:[%s1472 + $0x138] sm:$0xff]
    %v1513 = vld [vmem:[%s1472 + $0x140] sm:$0xff]
    %v1514 = vld [vmem:[%s1472 + $0x148] sm:$0xff]
    %v1515 = vld [vmem:[%s1472 + $0x150] sm:$0xff]
    %v1516 = vld [vmem:[%s1472 + $0x158] sm:$0xff]
    %v1517 = vld [vmem:[%s1472 + $0x160] sm:$0xff]
    %v1518 = vld [vmem:[%s1472 + $0x168] sm:$0xff]
    %v1519 = vld [vmem:[%s1472 + $0x170] sm:$0xff]
    %v1520 = vld [vmem:[%s1472 + $0x178] sm:$0xff]
    %v1521 = vld [vmem:[%s1472 + $0x180] sm:$0xff]
    %v1522 = vld [vmem:[%s1472 + $0x188] sm:$0xff]
    %v1523 = vld [vmem:[%s1472 + $0x190] sm:$0xff]
    %v1524 = vld [vmem:[%s1472 + $0x198] sm:$0xff]
    %v1525 = vld [vmem:[%s1472 + $0x1a0] sm:$0xff]
    %v1526 = vld [vmem:[%s1472 + $0x1a8] sm:$0xff]
    %v1527 = vld [vmem:[%s1472 + $0x1b0] sm:$0xff]
    %v1528 = vld [vmem:[%s1472 + $0x1b8] sm:$0xff]
    %v1529 = vld [vmem:[%s1472 + $0x1c0] sm:$0xff]
    %v1530 = vld [vmem:[%s1472 + $0x1c8] sm:$0xff]
    %v1531 = vld [vmem:[%s1472 + $0x1d0] sm:$0xff]
    %v1532 = vld [vmem:[%s1472 + $0x1d8] sm:$0xff]
    %v1533 = vld [vmem:[%s1472 + $0x1e0] sm:$0xff]
    %v1534 = vld [vmem:[%s1472 + $0x1e8] sm:$0xff]
    %v1535 = vld [vmem:[%s1472 + $0x1f0] sm:$0xff]
    %v1536 = vld [vmem:[%s1472 + $0x1f8] sm:$0xff]
    %v1538 = vlaneseq
    %v1539 = vshrl.u32 %v1538, 7
    %v1540 = vsub.s32 0, %v1539
    %v1541 = vrot.slane %v1471, %v1540
    %v1542 = vlaneseq
    %v1543 = vshrl.u32 %v1542, 7
    %v1544 = vsub.s32 1, %v1543
    %v1545 = vrot.slane %v1471, %v1544
    %1548 = vmatprep.subr.mxu0 %v1474
    %1549 = vmatpush1.msra.mxu0 %v1473
    %1550 = vmatprep.subr.mxu0 %v1476
    %1551 = vmatpush1.msra.mxu0 %v1475
    %1552 = vmatprep.subr.mxu0 %v1478
    %1553 = vmatpush1.msra.mxu0 %v1477
    %1554 = vmatprep.subr.mxu0 %v1480
    %1555 = vmatpush1.msra.mxu0 %v1479
    %1556 = vmatprep.subr.mxu0 %v1482
    %1557 = vmatpush1.msra.mxu0 %v1481
    %1558 = vmatprep.subr.mxu0 %v1484
    %1559 = vmatpush1.msra.mxu0 %v1483
    %1560 = vmatprep.subr.mxu0 %v1486
    %1561 = vmatpush1.msra.mxu0 %v1485
    %1562 = vmatprep.subr.mxu0 %v1488
    %1563 = vmatpush1.msra.mxu0 %v1487
    %1564 = vmatprep.subr.mxu0 %v1490
    %1565 = vmatpush1.msra.mxu0 %v1489
    %1566 = vmatprep.subr.mxu0 %v1492
    %1567 = vmatpush1.msra.mxu0 %v1491
    %1568 = vmatprep.subr.mxu0 %v1494
    %1569 = vmatpush1.msra.mxu0 %v1493
    %1570 = vmatprep.subr.mxu0 %v1496
    %1571 = vmatpush1.msra.mxu0 %v1495
    %1572 = vmatprep.subr.mxu0 %v1498
    %1573 = vmatpush1.msra.mxu0 %v1497
    %1574 = vmatprep.subr.mxu0 %v1500
    %1575 = vmatpush1.msra.mxu0 %v1499
    %1576 = vmatprep.subr.mxu0 %v1502
    %1577 = vmatpush1.msra.mxu0 %v1501
    %1578 = vmatprep.subr.mxu0 %v1504
    %1579 = vmatpush1.msra.mxu0 %v1503
    %1580 = vmatprep.subr.mxu0 %v1506
    %1581 = vmatpush1.msra.mxu0 %v1505
    %1582 = vmatprep.subr.mxu0 %v1508
    %1583 = vmatpush1.msra.mxu0 %v1507
    %1584 = vmatprep.subr.mxu0 %v1510
    %1585 = vmatpush1.msra.mxu0 %v1509
    %1586 = vmatprep.subr.mxu0 %v1512
    %1587 = vmatpush1.msra.mxu0 %v1511
    %1588 = vmatprep.subr.mxu0 %v1514
    %1589 = vmatpush1.msra.mxu0 %v1513
    %1590 = vmatprep.subr.mxu0 %v1516
    %1591 = vmatpush1.msra.mxu0 %v1515
    %1592 = vmatprep.subr.mxu0 %v1518
    %1593 = vmatpush1.msra.mxu0 %v1517
    %1594 = vmatprep.subr.mxu0 %v1520
    %1595 = vmatpush1.msra.mxu0 %v1519
    %1596 = vmatprep.subr.mxu0 %v1522
    %1597 = vmatpush1.msra.mxu0 %v1521
    %1598 = vmatprep.subr.mxu0 %v1524
    %1599 = vmatpush1.msra.mxu0 %v1523
    %1600 = vmatprep.subr.mxu0 %v1526
    %1601 = vmatpush1.msra.mxu0 %v1525
    %1602 = vmatprep.subr.mxu0 %v1528
    %1603 = vmatpush1.msra.mxu0 %v1527
    %1604 = vmatprep.subr.mxu0 %v1530
    %1605 = vmatpush1.msra.mxu0 %v1529
    %1606 = vmatprep.subr.mxu0 %v1532
    %1607 = vmatpush1.msra.mxu0 %v1531
    %1608 = vmatprep.subr.mxu0 %v1534
    %1609 = vmatpush1.msra.mxu0 %v1533
    %1610 = vmatprep.subr.mxu0 %v1536
    %1611 = vmatpush1.msra.mxu0 %v1535
    %1612 = vmatprep.mubr.f32.mxu0 %v1469
    %1613 = vmatmul.mubr.f32.gmra.mrb[0].mxu0 %v1468
    %v1614 = vpop.f32.mrb[0].mxu0
    %v1615 = vadd.f32 %v1541, %v1614
    %v1616 = vpop.f32.mrb[0].mxu0
    %v1617 = vadd.f32 %v1545, %v1616
    %1618 = vdwg.mxu0
    %vm1619 = vcmp.ge.f32.partialorder %v1615, 0.0
    %vm1620 = vcmp.ge.f32.partialorder %v1617, 0.0
    %v1621 = vsel %vm1619, 1.4142135, 0.28284273
    %v1622 = vsel %vm1620, 1.4142135, 0.28284273
    %v1623 = vmul.f32 %v1615, %v1621
    %v1624 = vmul.f32 %v1617, %v1622
    %v1627 = vcombine.low %v1623, %v1624
    %1629 = vst [vmem:[%s3] sm:$0xff] %v1627
    // Predicated region
    $region26: #{forward.1} parent=1 // pred_check
      _
    $region27: #{forward.1} parent=1 // pred_check_branch
      %1631 = sbr.rel (0) target = $region29
    $region28: #{forward.1} parent=1 // pred_region
      _
    $region29: #{forward.1} parent=1 // pred_fallthru
      _
    // Predicated region
    $region30: #{forward.1} parent=1 // pred_check
      _
    $region31: #{forward.1} parent=1 // pred_check_branch
      %1633 = sbr.rel (0) target = $region33
    $region32: #{forward.1} parent=1 // pred_region
      _
    $region33: #{forward.1} parent=1 // pred_fallthru
      _
    %1634 = vsyncpa [#allocation3], 1
    %1635 = vsyncpa [#allocation5], 1

</llo_original>
